<compile_context>
chip_gen: v5e
topology: v5e:2x2
jax: 0.10.0
libtpu: 0.0.40
codegen_flags: <defaults>
</compile_context>

<pallas_src>
import math
from collections import namedtuple

import jax
import jax.numpy as jnp
from jax import lax
from jax.experimental import pallas as pl
from jax.experimental.pallas import tpu as pltpu

LANE = 128
NEG_BIG = -1e30          # finite "minus infinity" for padded logit columns (f32)


def _round_up(a, b):
    return (a + b - 1) // b * b


def _vmem_capacity_bytes():
    try:
        info = pltpu.get_tpu_info()
        cap = getattr(info, "vmem_capacity_bytes", None)
        if cap:
            return int(cap)
    except Exception:
        pass
    return 128 << 20      # conservative default (v5e/v6e); v7x found via query


SplitSoftmaxPacked = namedtuple("SplitSoftmaxPacked", [
    "w_slab", "b_slab", "shortlist", "n_seg", "tc", "total_pad",
    "tail_meta", "in_features", "n_classes", "compute_dtype"])


def pack_split_softmax_params(weight, bias, tail_vectors, tail_bias, cutoffs,
                              n_classes, *, tc_max=512,
                              compute_dtype=jnp.bfloat16):
    """Pack head + tail weights ONCE into a single lane-padded (D, total_pad) slab.

    Column layout (all segments padded to a multiple of the chunk width tc so a
    class chunk never straddles two softmax segments):
      segment 0           : shortlist classes, then one logit per tail cluster
      segment i (i>=1)    : classes of tail cluster i
    Padded columns get zero weights and a -1e30 bias (never win max / contribute
    ~0 to the sum-exp). The bias slab stays f32.
    """
    cutlist = list(cutoffs) + [n_classes]
    shortlist = cutlist[0]
    n_clusters = len(cutlist)
    assert n_clusters >= 2, "Pallas path expects at least one tail cluster"
    cutoff_values = [0] + cutlist

    wt = jnp.asarray(weight, jnp.float32)            # (n_classes, D)
    b = jnp.asarray(bias, jnp.float32)               # (n_classes,)
    tv = jnp.asarray(tail_vectors, jnp.float32)      # (n_clusters-1, D)
    tb = jnp.asarray(tail_bias, jnp.float32)         # (n_clusters-1,)
    D = wt.shape[1]

    head_real = shortlist + (n_clusters - 1)
    seg_real = [head_real] + [cutoff_values[i + 1] - cutoff_values[i]
                              for i in range(1, n_clusters)]
    tc_max = max(LANE, _round_up(int(tc_max), LANE))
    tc = max(LANE, min(tc_max, _round_up(max(seg_real), LANE)))
    seg_pad = [_round_up(r, tc) for r in seg_real]
    col_start = [0]
    for p in seg_pad[:-1]:
        col_start.append(col_start[-1] + p)
    total_pad = sum(seg_pad)
    chunk_start = [cs // tc for cs in col_start]

    w_slab = jnp.zeros((D, total_pad), jnp.float32)
    b_slab = jnp.full((1, total_pad), NEG_BIG, jnp.float32)

    head_w = jnp.concatenate([wt[:shortlist], tv], axis=0)        # (head_real, D)
    head_b = jnp.concatenate([b[:shortlist], tb], axis=0)
    w_slab = w_slab.at[:, :head_real].set(head_w.T)
    b_slab = b_slab.at[0, :head_real].set(head_b)

    tail_meta = []       # static: (seg_idx, low, high, col_start, chunk_start)
    for i in range(1, n_clusters):
        low, high = cutoff_values[i], cutoff_values[i + 1]
        cs = col_start[i]
        w_slab = w_slab.at[:, cs:cs + (high - low)].set(wt[low:high].T)
        b_slab = b_slab.at[0, cs:cs + (high - low)].set(b[low:high])
        tail_meta.append((i, low, high, cs, chunk_start[i]))

    w_slab = w_slab.astype(compute_dtype)     # bias stays f32 (NEG_BIG safe)

    return SplitSoftmaxPacked(w_slab, b_slab, shortlist, n_clusters, tc,
                              total_pad, tuple(tail_meta), D, n_classes,
                              jnp.dtype(compute_dtype))


def _make_kernel(shortlist, tail_meta, seg_width):
    """tail_meta: static tuple of (seg_idx, low, high, col_start, chunk_start)."""

    def kernel(x_ref, tgt_ref, w_ref, b_ref, out_ref, m_acc, s_acc, gh_acc, gt_acc):
        c = pl.program_id(1)
        n_chunks = pl.num_programs(1)
        tm = x_ref.shape[0]
        tc = w_ref.shape[1]

        # ---- init per-segment accumulators at the first class chunk ----
        @pl.when(c == 0)
        def _():
            m_acc[...] = jnp.full(m_acc.shape, NEG_BIG, jnp.float32)
            s_acc[...] = jnp.zeros(s_acc.shape, jnp.float32)
            gh_acc[...] = jnp.zeros(gh_acc.shape, jnp.float32)
            gt_acc[...] = jnp.zeros(gt_acc.shape, jnp.float32)

        # ---- one fused MXU pass over this class chunk (head + tail share it) ----
        logits = (jnp.dot(x_ref[...], w_ref[...],
                          preferred_element_type=jnp.float32)
                  + b_ref[...])                                    # (tm, tc) f32

        # ---- which segment (0 = head, i = tail cluster i) owns this chunk ----
        seg = jnp.int32(0)
        for si, _lo, _hi, _cs, chk in tail_meta:
            seg = jnp.where(c >= chk, jnp.int32(si), seg)
        is_head = seg == 0

        # ---- per-row target metadata (cheap (tm, 1) ops) ----
        tgt = tgt_ref[...]                                         # (tm, 1) int32
        row_seg = jnp.zeros_like(tgt)
        gidx = tgt                                                 # head gather col
        tail_col = jnp.full_like(tgt, -1)                          # abs tail col
        for si, lo, hi, cs, _chk in tail_meta:
            in_c = (tgt >= lo) & (tgt < hi)
            row_seg = jnp.where(in_c, jnp.int32(si), row_seg)
            gidx = jnp.where(in_c, jnp.int32(shortlist + si - 1), gidx)
            tail_col = jnp.where(in_c, cs + (tgt - lo), tail_col)

        # ---- online max / sum-exp update for this chunk's segment ----
        lane_seg = lax.broadcasted_iota(jnp.int32, (tm, seg_width), 1)
        sel = lane_seg == seg
        m_prev = jnp.sum(jnp.where(sel, m_acc[...], 0.0), axis=1, keepdims=True)
        s_prev = jnp.sum(jnp.where(sel, s_acc[...], 0.0), axis=1, keepdims=True)
        c_max = jnp.max(logits, axis=1, keepdims=True)
        m_new = jnp.maximum(m_prev, c_max)
        p_sum = jnp.sum(jnp.exp(logits - m_new), axis=1, keepdims=True)
        s_new = s_prev * jnp.exp(m_prev - m_new) + p_sum
        m_acc[...] = jnp.where(sel, m_new, m_acc[...])
        s_acc[...] = jnp.where(sel, s_new, s_acc[...])

        # ---- gather the target logit in this chunk (single compare/select) ----
        gcol = jnp.where(is_head, gidx,
                         jnp.where(row_seg == seg, tail_col, jnp.int32(-1)))
        rel = gcol - c * tc                                        # (tm, 1)
        lane = lax.broadcasted_iota(jnp.int32, (tm, tc), 1)
        contrib = jnp.sum(jnp.where(lane == rel, logits, 0.0),
                          axis=1, keepdims=True)
        gh_acc[...] = gh_acc[...] + jnp.where(is_head, contrib, 0.0)
        gt_acc[...] = gt_acc[...] + jnp.where(is_head, 0.0, contrib)

        # ---- finalize: per-row log-prob, lane-dense (1, tm) store via XLU ----
        @pl.when(c == n_chunks - 1)
        def _():
            out = gh_acc[...] - m_acc[:, 0:1] - jnp.log(s_acc[:, 0:1])
            for si, _lo, _hi, _cs, _chk in tail_meta:
                local = (gt_acc[...] - m_acc[:, si:si + 1]
                         - jnp.log(s_acc[:, si:si + 1]))
                out = out + jnp.where(row_seg == jnp.int32(si), local, 0.0)
            # (tm,1) -> (1,tm): lane-broadcast + aligned XLU transpose (no tm^2 temp)
            t = jnp.transpose(jnp.broadcast_to(out, (tm, LANE)), (1, 0))  # (LANE, tm)
            out_ref[...] = t[0:1, :]

    return kernel


def split_softmax_with_loss(x, target, packed, *, tm=256):
    """Pallas-backed forward. Returns (output[N], loss) like _ASMoutput."""
    N, D = x.shape
    assert D == packed.in_features
    cdt = packed.compute_dtype
    tc = packed.tc
    total_pad = packed.total_pad
    n_chunks = total_pad // tc
    seg_width = max(packed.n_seg, 8)

    # batch tile: lane-aligned, and >= 2 grid steps when possible (v7x megacore)
    tm_eff = max(LANE, (int(tm) // LANE) * LANE)
    while tm_eff > LANE and _round_up(max(N, 1), tm_eff) // tm_eff < 2:
        tm_eff = max(LANE, (tm_eff // 2 // LANE) * LANE)
    N_pad = _round_up(max(N, 1), tm_eff)

    xp = jnp.zeros((N_pad, D), jnp.float32).at[:N].set(jnp.asarray(x, jnp.float32))
    xp = xp.astype(cdt)
    tp = jnp.zeros((N_pad, 1), jnp.int32).at[:N, 0].set(jnp.asarray(target, jnp.int32))

    kernel = _make_kernel(packed.shortlist, packed.tail_meta, seg_width)
    grid = (N_pad // tm_eff, n_chunks)

    # ---- VMEM budget: double-buffered per-step blocks + temporaries + scratch ----
    bpe = jnp.dtype(cdt).itemsize
    per_step = tm_eff * D * bpe + D * tc * bpe + tc * 4 + tm_eff * 4 + tm_eff * 4
    temps = 4 * tm_eff * tc * 4 + 2 * tm_eff * LANE * 4
    scratch = (2 * tm_eff * seg_width + 2 * tm_eff) * 4
    needed = 2 * per_step + temps + scratch
    cap = _vmem_capacity_bytes()
    vmem_limit = int(max(32 << 20, min(needed + (8 << 20), cap - (12 << 20))))

    n_btiles = N_pad // tm_eff
    cost = pl.CostEstimate(
        flops=2 * N_pad * D * total_pad,
        transcendentals=N_pad * total_pad,
        bytes_accessed=int(n_btiles * (D * total_pad * bpe + total_pad * 4)
                           + N_pad * D * bpe + 2 * N_pad * 4))

    out = pl.pallas_call(
        kernel,
        out_shape=jax.ShapeDtypeStruct((1, N_pad), jnp.float32),
        grid_spec=pltpu.PrefetchScalarGridSpec(
            num_scalar_prefetch=0,
            grid=grid,
            in_specs=[
                pl.BlockSpec((tm_eff, D), lambda i, c: (i, 0)),    # x tile
                pl.BlockSpec((tm_eff, 1), lambda i, c: (i, 0)),    # targets
                pl.BlockSpec((D, tc), lambda i, c: (0, c)),        # weight chunk
                pl.BlockSpec((1, tc), lambda i, c: (0, c)),        # bias chunk (f32)
            ],
            out_specs=pl.BlockSpec((1, tm_eff), lambda i, c: (0, i)),  # lane-dense
            scratch_shapes=[
                pltpu.VMEM((tm_eff, seg_width), jnp.float32),      # running max
                pltpu.VMEM((tm_eff, seg_width), jnp.float32),      # running sum-exp
                pltpu.VMEM((tm_eff, 1), jnp.float32),              # gathered head logit
                pltpu.VMEM((tm_eff, 1), jnp.float32),              # gathered tail logit
            ]),
        compiler_params=pltpu.CompilerParams(
            dimension_semantics=("parallel", "arbitrary"),
            vmem_limit_bytes=vmem_limit),
        cost_estimate=cost,
    )(xp, tp, packed.w_slab, packed.b_slab)

    output = out[0, :N]
    loss = jnp.mean(-output)            # reduce_fn = torch.mean
    return output, loss


def reference_forward(x, target, weight, bias, tail_vectors, tail_bias,
                      cutoffs, n_classes):
    """Pure-JAX reference mirroring the PyTorch forward semantics."""
    cutlist = list(cutoffs) + [n_classes]
    shortlist = cutlist[0]
    n_clusters = len(cutlist)
    cutoff_values = [0] + cutlist

    head_w = jnp.concatenate([weight[:shortlist], tail_vectors], axis=0)
    head_b = jnp.concatenate([bias[:shortlist], tail_bias], axis=0)
    head_logits = x @ head_w.T + head_b
    head_lp = jax.nn.log_softmax(head_logits, axis=1)

    N = x.shape[0]
    output = jnp.zeros((N,), jnp.float32)
    gidx = target
    for i in range(1, n_clusters):
        low, high = cutoff_values[i], cutoff_values[i + 1]
        mask = (target >= low) & (target < high)
        cl_logits = x @ weight[low:high].T + bias[low:high]
        cl_lp = jax.nn.log_softmax(cl_logits, axis=1)
        rel = jnp.clip(target - low, 0, high - low - 1)
        local = jnp.take_along_axis(cl_lp, rel[:, None], axis=1)[:, 0]
        output = output + jnp.where(mask, local, 0.0)
        gidx = jnp.where(mask, shortlist + i - 1, gidx)
    head_local = jnp.take_along_axis(head_lp, gidx[:, None], axis=1)[:, 0]
    output = output + head_local
    return output, jnp.mean(-output)


if __name__ == "__main__":
    # Small shapes consistent with the module: (N, in_features) input, (N,) targets.
    # N is deliberately NOT a multiple of the tile to exercise batch padding, and
    # the default tm=256 is auto-shrunk to 128 so the batch grid has 2 steps.
    N, in_features, n_classes = 200, 128, 160
    cutoffs = [64, 112]            # shortlist = 64, tail clusters of 48 and 48

    key = jax.random.PRNGKey(0)
    k_x, k_t, k_w, k_b, k_tv = jax.random.split(key, 5)

    bound = 1.0 / math.sqrt(in_features)
    weight = jax.random.uniform(k_w, (n_classes, in_features),
                                jnp.float32, -bound, bound)
    bias = 0.05 * jax.random.normal(k_b, (n_classes,), jnp.float32)
    n_clusters = len(cutoffs) + 1
    tail_vectors = 0.1 * jax.random.normal(k_tv, (n_clusters - 1, in_features),
                                           jnp.float32)
    tail_bias = jnp.zeros((n_clusters - 1,), jnp.float32)

    x = jax.random.normal(k_x, (N, in_features), jnp.float32)
    target = jax.random.randint(k_t, (N,), 0, n_classes, jnp.int32)

    ref_out, ref_loss = reference_forward(
        x, target, weight, bias, tail_vectors, tail_bias, cutoffs, n_classes)

    # f32 MXU-operand path (strict check); weights packed once, reused per call.
    packed_f32 = pack_split_softmax_params(
        weight, bias, tail_vectors, tail_bias, cutoffs, n_classes,
        compute_dtype=jnp.float32)
    output, loss = split_softmax_with_loss(x, target, packed_f32, tm=256)
    output = jax.block_until_ready(output)
    loss = jax.block_until_ready(loss)
    assert output.shape == (N,)
    assert jnp.allclose(output, ref_out, rtol=1e-4, atol=1e-4), (output, ref_out)
    assert jnp.allclose(loss, ref_loss, rtol=1e-4, atol=1e-4), (loss, ref_loss)

    # bf16 MXU-operand path (default; f32 accumulation + f32 softmax math); loose.
    packed_bf16 = pack_split_softmax_params(
        weight, bias, tail_vectors, tail_bias, cutoffs, n_classes,
        compute_dtype=jnp.bfloat16)
    out_bf, loss_bf = split_softmax_with_loss(x, target, packed_bf16, tm=256)
    out_bf = jax.block_until_ready(out_bf)
    loss_bf = jax.block_until_ready(loss_bf)
    assert jnp.allclose(out_bf, ref_out, rtol=1e-1, atol=1e-1), (out_bf, ref_out)
    assert jnp.allclose(loss_bf, ref_loss, rtol=1e-1, atol=1e-1), (loss_bf, ref_loss)

    print("KERNEL_OK")
</pallas_src>

<mosaic_0001>
module attributes {stable_mosaic.version = 11 : i64} {
  func.func @kernel(%arg0: i32, %arg1: i32, %arg2: memref<128x128xf32, #tpu.memory_space<vmem>>, %arg3: memref<128x1xi32, #tpu.memory_space<vmem>>, %arg4: memref<128x128xf32, #tpu.memory_space<vmem>>, %arg5: memref<1x128xf32, #tpu.memory_space<vmem>>, %arg6: memref<1x128xf32, #tpu.memory_space<vmem>>, %arg7: memref<128x8xf32, #tpu.memory_space<vmem>>, %arg8: memref<128x8xf32, #tpu.memory_space<vmem>>, %arg9: memref<128x1xf32, #tpu.memory_space<vmem>>, %arg10: memref<128x1xf32, #tpu.memory_space<vmem>>) attributes {dimension_semantics = [#tpu.dimension_semantics<parallel>, #tpu.dimension_semantics<arbitrary>], iteration_bounds = array<i64: 2, 3>, scalar_prefetch = 0 : i64, scratch_operands = 4 : i64, tpu.core_type = #tpu.core_type<tc>, window_params = [{transform_indices = @transform_0, window_bounds = array<i64: 128, 128>}, {transform_indices = @transform_1, window_bounds = array<i64: 128, 1>}, {transform_indices = @transform_2, window_bounds = array<i64: 128, 128>}, {transform_indices = @transform_3, window_bounds = array<i64: 1, 128>}, {transform_indices = @transform_4, window_bounds = array<i64: 1, 128>}]} {
    %c0_i32 = arith.constant 0 : i32
    %0 = arith.cmpi eq, %arg1, %c0_i32 : i32
    %1 = arith.extui %0 : i1 to i32
    %c0_i32_0 = arith.constant 0 : i32
    %2 = arith.cmpi ne, %1, %c0_i32_0 : i32
    scf.if %2 {
      %cst_53 = arith.constant -1.000000e+30 : f32
      %108 = vector.broadcast %cst_53 : f32 to vector<128x8xf32>
      %c0_54 = arith.constant 0 : index
      %c0_55 = arith.constant 0 : index
      %109 = vector.load %arg7[%c0_54, %c0_55] : memref<128x8xf32, #tpu.memory_space<vmem>>, vector<128x8xf32>
      tpu.vector_store %arg7[%c0_54, %c0_55], %108 {strides = array<i32>} : memref<128x8xf32, #tpu.memory_space<vmem>>, vector<128x8xf32>,
      %cst_56 = arith.constant 0.000000e+00 : f32
      %110 = vector.broadcast %cst_56 : f32 to vector<128x8xf32>
      %c0_57 = arith.constant 0 : index
      %c0_58 = arith.constant 0 : index
      %111 = vector.load %arg8[%c0_57, %c0_58] : memref<128x8xf32, #tpu.memory_space<vmem>>, vector<128x8xf32>
      tpu.vector_store %arg8[%c0_57, %c0_58], %110 {strides = array<i32>} : memref<128x8xf32, #tpu.memory_space<vmem>>, vector<128x8xf32>,
      %cst_59 = arith.constant 0.000000e+00 : f32
      %112 = vector.broadcast %cst_59 : f32 to vector<128x1xf32>
      %c0_60 = arith.constant 0 : index
      %c0_61 = arith.constant 0 : index
      %113 = vector.load %arg9[%c0_60, %c0_61] : memref<128x1xf32, #tpu.memory_space<vmem>>, vector<128x1xf32>
      tpu.vector_store %arg9[%c0_60, %c0_61], %112 {strides = array<i32>} : memref<128x1xf32, #tpu.memory_space<vmem>>, vector<128x1xf32>,
      %cst_62 = arith.constant 0.000000e+00 : f32
      %114 = vector.broadcast %cst_62 : f32 to vector<128x1xf32>
      %c0_63 = arith.constant 0 : index
      %c0_64 = arith.constant 0 : index
      %115 = vector.load %arg10[%c0_63, %c0_64] : memref<128x1xf32, #tpu.memory_space<vmem>>, vector<128x1xf32>
      tpu.vector_store %arg10[%c0_63, %c0_64], %114 {strides = array<i32>} : memref<128x1xf32, #tpu.memory_space<vmem>>, vector<128x1xf32>,
    } else {
    }
    %c0 = arith.constant 0 : index
    %c0_1 = arith.constant 0 : index
    %3 = vector.load %arg2[%c0, %c0_1] : memref<128x128xf32, #tpu.memory_space<vmem>>, vector<128x128xf32>
    %c0_2 = arith.constant 0 : index
    %c0_3 = arith.constant 0 : index
    %4 = vector.load %arg4[%c0_2, %c0_3] : memref<128x128xf32, #tpu.memory_space<vmem>>, vector<128x128xf32>
    %cst = arith.constant dense<0.000000e+00> : vector<128x128xf32>
    %5 = tpu.matmul %3, %4, %cst {dimension_numbers = #tpu.dot_dimension_numbers<[1], [0], [0], [1], [0, 0, 1, 1], [], []>} : vector<128x128xf32>, vector<128x128xf32>, vector<128x128xf32> -> vector<128x128xf32>
    %c0_4 = arith.constant 0 : index
    %c0_5 = arith.constant 0 : index
    %6 = vector.load %arg5[%c0_4, %c0_5] : memref<1x128xf32, #tpu.memory_space<vmem>>, vector<1x128xf32>
    %7 = vector.broadcast %6 : vector<1x128xf32> to vector<128x128xf32>
    %8 = arith.addf %5, %7 : vector<128x128xf32>
    %c1_i32 = arith.constant 1 : i32
    %9 = arith.cmpi sge, %arg1, %c1_i32 : i32
    %c1_i32_6 = arith.constant 1 : i32
    %c0_i32_7 = arith.constant 0 : i32
    %10 = arith.select %9, %c1_i32_6, %c0_i32_7 : i32
    %c2_i32 = arith.constant 2 : i32
    %11 = arith.cmpi sge, %arg1, %c2_i32 : i32
    %c2_i32_8 = arith.constant 2 : i32
    %12 = arith.select %11, %c2_i32_8, %10 : i32
    %c0_i32_9 = arith.constant 0 : i32
    %13 = arith.cmpi eq, %12, %c0_i32_9 : i32
    %c0_10 = arith.constant 0 : index
    %c0_11 = arith.constant 0 : index
    %14 = vector.load %arg3[%c0_10, %c0_11] : memref<128x1xi32, #tpu.memory_space<vmem>>, vector<128x1xi32>
    %c0_i32_12 = arith.constant 0 : i32
    %15 = vector.broadcast %c0_i32_12 : i32 to vector<128x1xi32>
    %c-1_i32 = arith.constant -1 : i32
    %16 = vector.broadcast %c-1_i32 : i32 to vector<128x1xi32>
    %c64_i32 = arith.constant 64 : i32
    %17 = vector.broadcast %c64_i32 : i32 to vector<128x1xi32>
    %18 = arith.cmpi sge, %14, %17 : vector<128x1xi32>
    %c112_i32 = arith.constant 112 : i32
    %19 = vector.broadcast %c112_i32 : i32 to vector<128x1xi32>
    %20 = arith.cmpi slt, %14, %19 : vector<128x1xi32>
    %21 = arith.andi %18, %20 : vector<128x1xi1>
    %c1_i32_13 = arith.constant 1 : i32
    %22 = vector.broadcast %c1_i32_13 : i32 to vector<128x1xi32>
    %23 = arith.select %21, %22, %15 : vector<128x1xi1>, vector<128x1xi32>
    %c64_i32_14 = arith.constant 64 : i32
    %24 = vector.broadcast %c64_i32_14 : i32 to vector<128x1xi32>
    %25 = arith.select %21, %24, %14 : vector<128x1xi1>, vector<128x1xi32>
    %c64_i32_15 = arith.constant 64 : i32
    %26 = vector.broadcast %c64_i32_15 : i32 to vector<128x1xi32>
    %27 = arith.subi %14, %26 : vector<128x1xi32>
    %c128_i32 = arith.constant 128 : i32
    %28 = vector.broadcast %c128_i32 : i32 to vector<128x1xi32>
    %29 = arith.addi %28, %27 : vector<128x1xi32>
    %30 = arith.select %21, %29, %16 : vector<128x1xi1>, vector<128x1xi32>
    %c112_i32_16 = arith.constant 112 : i32
    %31 = vector.broadcast %c112_i32_16 : i32 to vector<128x1xi32>
    %32 = arith.cmpi sge, %14, %31 : vector<128x1xi32>
    %c160_i32 = arith.constant 160 : i32
    %33 = vector.broadcast %c160_i32 : i32 to vector<128x1xi32>
    %34 = arith.cmpi slt, %14, %33 : vector<128x1xi32>
    %35 = arith.andi %32, %34 : vector<128x1xi1>
    %c2_i32_17 = arith.constant 2 : i32
    %36 = vector.broadcast %c2_i32_17 : i32 to vector<128x1xi32>
    %37 = arith.select %35, %36, %23 : vector<128x1xi1>, vector<128x1xi32>
    %c65_i32 = arith.constant 65 : i32
    %38 = vector.broadcast %c65_i32 : i32 to vector<128x1xi32>
    %39 = arith.select %35, %38, %25 : vector<128x1xi1>, vector<128x1xi32>
    %c112_i32_18 = arith.constant 112 : i32
    %40 = vector.broadcast %c112_i32_18 : i32 to vector<128x1xi32>
    %41 = arith.subi %14, %40 : vector<128x1xi32>
    %c256_i32 = arith.constant 256 : i32
    %42 = vector.broadcast %c256_i32 : i32 to vector<128x1xi32>
    %43 = arith.addi %42, %41 : vector<128x1xi32>
    %44 = arith.select %35, %43, %30 : vector<128x1xi1>, vector<128x1xi32>
    %45 = tpu.iota {dimensions = array<i32: 1>} : vector<128x8xi32>
    %46 = vector.broadcast %12 : i32 to vector<128x8xi32>
    %47 = arith.cmpi eq, %45, %46 : vector<128x8xi32>
    %c0_19 = arith.constant 0 : index
    %c0_20 = arith.constant 0 : index
    %48 = vector.load %arg7[%c0_19, %c0_20] : memref<128x8xf32, #tpu.memory_space<vmem>>, vector<128x8xf32>
    %cst_21 = arith.constant 0.000000e+00 : f32
    %49 = vector.broadcast %cst_21 : f32 to vector<128x8xf32>
    %50 = arith.select %47, %48, %49 : vector<128x8xi1>, vector<128x8xf32>
    %cst_22 = arith.constant dense<0.000000e+00> : vector<128xf32>
    %51 = vector.multi_reduction <add>, %50, %cst_22 [1] : vector<128x8xf32> to vector<128xf32>
    %52 = vector.shape_cast %51 : vector<128xf32> to vector<128x1xf32>
    %c0_23 = arith.constant 0 : index
    %c0_24 = arith.constant 0 : index
    %53 = vector.load %arg8[%c0_23, %c0_24] : memref<128x8xf32, #tpu.memory_space<vmem>>, vector<128x8xf32>
    %cst_25 = arith.constant 0.000000e+00 : f32
    %54 = vector.broadcast %cst_25 : f32 to vector<128x8xf32>
    %55 = arith.select %47, %53, %54 : vector<128x8xi1>, vector<128x8xf32>
    %cst_26 = arith.constant dense<0.000000e+00> : vector<128xf32>
    %56 = vector.multi_reduction <add>, %55, %cst_26 [1] : vector<128x8xf32> to vector<128xf32>
    %57 = vector.shape_cast %56 : vector<128xf32> to vector<128x1xf32>
    %cst_27 = arith.constant dense<0xFF800000> : vector<128xf32>
    %58 = vector.multi_reduction <maximumf>, %8, %cst_27 [1] : vector<128x128xf32> to vector<128xf32>
    %59 = vector.shape_cast %58 : vector<128xf32> to vector<128x1xf32>
    %60 = arith.maximumf %52, %59 : vector<128x1xf32>
    %61 = vector.broadcast %60 : vector<128x1xf32> to vector<128x128xf32>
    %62 = arith.subf %8, %61 : vector<128x128xf32>
    %63 = math.exp %62 : vector<128x128xf32>
    %cst_28 = arith.constant dense<0.000000e+00> : vector<128xf32>
    %64 = vector.multi_reduction <add>, %63, %cst_28 [1] : vector<128x128xf32> to vector<128xf32>
    %65 = vector.shape_cast %64 : vector<128xf32> to vector<128x1xf32>
    %66 = arith.subf %52, %60 : vector<128x1xf32>
    %67 = math.exp %66 : vector<128x1xf32>
    %68 = arith.mulf %57, %67 : vector<128x1xf32>
    %69 = arith.addf %68, %65 : vector<128x1xf32>
    %c0_29 = arith.constant 0 : index
    %c0_30 = arith.constant 0 : index
    %70 = vector.load %arg7[%c0_29, %c0_30] : memref<128x8xf32, #tpu.memory_space<vmem>>, vector<128x8xf32>
    %71 = vector.shape_cast %60 : vector<128x1xf32> to vector<128x1xf32>
    %72 = vector.broadcast %71 : vector<128x1xf32> to vector<128x8xf32>
    %73 = arith.select %47, %72, %70 : vector<128x8xi1>, vector<128x8xf32>
    %c0_31 = arith.constant 0 : index
    %c0_32 = arith.constant 0 : index
    %74 = vector.load %arg7[%c0_31, %c0_32] : memref<128x8xf32, #tpu.memory_space<vmem>>, vector<128x8xf32>
    tpu.vector_store %arg7[%c0_31, %c0_32], %73 {strides = array<i32>} : memref<128x8xf32, #tpu.memory_space<vmem>>, vector<128x8xf32>,
    %c0_33 = arith.constant 0 : index
    %c0_34 = arith.constant 0 : index
    %75 = vector.load %arg8[%c0_33, %c0_34] : memref<128x8xf32, #tpu.memory_space<vmem>>, vector<128x8xf32>
    %76 = vector.shape_cast %69 : vector<128x1xf32> to vector<128x1xf32>
    %77 = vector.broadcast %76 : vector<128x1xf32> to vector<128x8xf32>
    %78 = arith.select %47, %77, %75 : vector<128x8xi1>, vector<128x8xf32>
    %c0_35 = arith.constant 0 : index
    %c0_36 = arith.constant 0 : index
    %79 = vector.load %arg8[%c0_35, %c0_36] : memref<128x8xf32, #tpu.memory_space<vmem>>, vector<128x8xf32>
    tpu.vector_store %arg8[%c0_35, %c0_36], %78 {strides = array<i32>} : memref<128x8xf32, #tpu.memory_space<vmem>>, vector<128x8xf32>,
    %80 = vector.broadcast %12 : i32 to vector<128x1xi32>
    %81 = arith.cmpi eq, %37, %80 : vector<128x1xi32>
    %c-1_i32_37 = arith.constant -1 : i32
    %82 = vector.broadcast %c-1_i32_37 : i32 to vector<128x1xi32>
    %83 = arith.select %81, %44, %82 : vector<128x1xi1>, vector<128x1xi32>
    %84 = arith.select %13, %39, %83 : vector<128x1xi32>
    %c128_i32_38 = arith.constant 128 : i32
    %85 = arith.muli %arg1, %c128_i32_38 : i32
    %86 = vector.broadcast %85 : i32 to vector<128x1xi32>
    %87 = arith.subi %84, %86 : vector<128x1xi32>
    %88 = tpu.iota {dimensions = array<i32: 1>} : vector<128x128xi32>
    %89 = vector.broadcast %87 : vector<128x1xi32> to vector<128x128xi32>
    %90 = arith.cmpi eq, %88, %89 : vector<128x128xi32>
    %cst_39 = arith.constant 0.000000e+00 : f32
    %91 = vector.broadcast %cst_39 : f32 to vector<128x128xf32>
    %92 = arith.select %90, %8, %91 : vector<128x128xi1>, vector<128x128xf32>
    %cst_40 = arith.constant dense<0.000000e+00> : vector<128xf32>
    %93 = vector.multi_reduction <add>, %92, %cst_40 [1] : vector<128x128xf32> to vector<128xf32>
    %94 = vector.shape_cast %93 : vector<128xf32> to vector<128x1xf32>
    %c0_41 = arith.constant 0 : index
    %c0_42 = arith.constant 0 : index
    %95 = vector.load %arg9[%c0_41, %c0_42] : memref<128x1xf32, #tpu.memory_space<vmem>>, vector<128x1xf32>
    %cst_43 = arith.constant 0.000000e+00 : f32
    %96 = vector.broadcast %cst_43 : f32 to vector<128x1xf32>
    %97 = arith.select %13, %94, %96 : vector<128x1xf32>
    %98 = arith.addf %95, %97 : vector<128x1xf32>
    %c0_44 = arith.constant 0 : index
    %c0_45 = arith.constant 0 : index
    %99 = vector.load %arg9[%c0_44, %c0_45] : memref<128x1xf32, #tpu.memory_space<vmem>>, vector<128x1xf32>
    tpu.vector_store %arg9[%c0_44, %c0_45], %98 {strides = array<i32>} : memref<128x1xf32, #tpu.memory_space<vmem>>, vector<128x1xf32>,
    %c0_46 = arith.constant 0 : index
    %c0_47 = arith.constant 0 : index
    %100 = vector.load %arg10[%c0_46, %c0_47] : memref<128x1xf32, #tpu.memory_space<vmem>>, vector<128x1xf32>
    %cst_48 = arith.constant 0.000000e+00 : f32
    %101 = vector.broadcast %cst_48 : f32 to vector<128x1xf32>
    %102 = arith.select %13, %101, %94 : vector<128x1xf32>
    %103 = arith.addf %100, %102 : vector<128x1xf32>
    %c0_49 = arith.constant 0 : index
    %c0_50 = arith.constant 0 : index
    %104 = vector.load %arg10[%c0_49, %c0_50] : memref<128x1xf32, #tpu.memory_space<vmem>>, vector<128x1xf32>
    tpu.vector_store %arg10[%c0_49, %c0_50], %103 {strides = array<i32>} : memref<128x1xf32, #tpu.memory_space<vmem>>, vector<128x1xf32>,
    %c2_i32_51 = arith.constant 2 : i32
    %105 = arith.cmpi eq, %arg1, %c2_i32_51 : i32
    %106 = arith.extui %105 : i1 to i32
    %c0_i32_52 = arith.constant 0 : i32
    %107 = arith.cmpi ne, %106, %c0_i32_52 : i32
    scf.if %107 {
      %c0_53 = arith.constant 0 : index
      %c0_54 = arith.constant 0 : index
      %108 = vector.load %arg9[%c0_53, %c0_54] : memref<128x1xf32, #tpu.memory_space<vmem>>, vector<128x1xf32>
      %c0_55 = arith.constant 0 : index
      %c0_56 = arith.constant 0 : index
      %109 = vector.load %arg7[%c0_55, %c0_56] : memref<128x8xf32, #tpu.memory_space<vmem>>, vector<128x1xf32>
      %110 = arith.subf %108, %109 : vector<128x1xf32>
      %c0_57 = arith.constant 0 : index
      %c0_58 = arith.constant 0 : index
      %111 = vector.load %arg8[%c0_57, %c0_58] : memref<128x8xf32, #tpu.memory_space<vmem>>, vector<128x1xf32>
      %112 = math.log %111 : vector<128x1xf32>
      %113 = arith.subf %110, %112 : vector<128x1xf32>
      %c0_59 = arith.constant 0 : index
      %c0_60 = arith.constant 0 : index
      %114 = vector.load %arg10[%c0_59, %c0_60] : memref<128x1xf32, #tpu.memory_space<vmem>>, vector<128x1xf32>
      %c0_61 = arith.constant 0 : index
      %c1 = arith.constant 1 : index
      %115 = vector.load %arg7[%c0_61, %c1] : memref<128x8xf32, #tpu.memory_space<vmem>>, vector<128x1xf32>
      %116 = arith.subf %114, %115 : vector<128x1xf32>
      %c0_62 = arith.constant 0 : index
      %c1_63 = arith.constant 1 : index
      %117 = vector.load %arg8[%c0_62, %c1_63] : memref<128x8xf32, #tpu.memory_space<vmem>>, vector<128x1xf32>
      %118 = math.log %117 : vector<128x1xf32>
      %119 = arith.subf %116, %118 : vector<128x1xf32>
      %c1_i32_64 = arith.constant 1 : i32
      %120 = vector.broadcast %c1_i32_64 : i32 to vector<128x1xi32>
      %121 = arith.cmpi eq, %37, %120 : vector<128x1xi32>
      %cst_65 = arith.constant 0.000000e+00 : f32
      %122 = vector.broadcast %cst_65 : f32 to vector<128x1xf32>
      %123 = arith.select %121, %119, %122 : vector<128x1xi1>, vector<128x1xf32>
      %124 = arith.addf %113, %123 : vector<128x1xf32>
      %c0_66 = arith.constant 0 : index
      %c0_67 = arith.constant 0 : index
      %125 = vector.load %arg10[%c0_66, %c0_67] : memref<128x1xf32, #tpu.memory_space<vmem>>, vector<128x1xf32>
      %c0_68 = arith.constant 0 : index
      %c2 = arith.constant 2 : index
      %126 = vector.load %arg7[%c0_68, %c2] : memref<128x8xf32, #tpu.memory_space<vmem>>, vector<128x1xf32>
      %127 = arith.subf %125, %126 : vector<128x1xf32>
      %c0_69 = arith.constant 0 : index
      %c2_70 = arith.constant 2 : index
      %128 = vector.load %arg8[%c0_69, %c2_70] : memref<128x8xf32, #tpu.memory_space<vmem>>, vector<128x1xf32>
      %129 = math.log %128 : vector<128x1xf32>
      %130 = arith.subf %127, %129 : vector<128x1xf32>
      %c2_i32_71 = arith.constant 2 : i32
      %131 = vector.broadcast %c2_i32_71 : i32 to vector<128x1xi32>
      %132 = arith.cmpi eq, %37, %131 : vector<128x1xi32>
      %cst_72 = arith.constant 0.000000e+00 : f32
      %133 = vector.broadcast %cst_72 : f32 to vector<128x1xf32>
      %134 = arith.select %132, %130, %133 : vector<128x1xi1>, vector<128x1xf32>
      %135 = arith.addf %124, %134 : vector<128x1xf32>
      %136 = vector.shape_cast %135 : vector<128x1xf32> to vector<128x1xf32>
      %137 = vector.broadcast %136 : vector<128x1xf32> to vector<128x128xf32>
      %138 = tpu.transpose %137, [1, 0] : vector<128x128xf32> -> vector<128x128xf32>
      %139 = vector.extract_strided_slice %138 {offsets = [0, 0], sizes = [1, 128], strides = [1, 1]} : vector<128x128xf32> to vector<1x128xf32>
      %c0_73 = arith.constant 0 : index
      %c0_74 = arith.constant 0 : index
      %140 = vector.load %arg6[%c0_73, %c0_74] : memref<1x128xf32, #tpu.memory_space<vmem>>, vector<1x128xf32>
      tpu.vector_store %arg6[%c0_73, %c0_74], %139 {strides = array<i32>} : memref<1x128xf32, #tpu.memory_space<vmem>>, vector<1x128xf32>,
    } else {
    }
    return
  }
  func.func @transform_0(%arg0: i32, %arg1: i32) -> (i32, i32) {
    %c0_i32 = arith.constant 0 : i32
    %c0_i32_0 = arith.constant 0 : i32
    return %arg0, %c0_i32 : i32, i32
  }
  func.func @transform_1(%arg0: i32, %arg1: i32) -> (i32, i32) {
    %c0_i32 = arith.constant 0 : i32
    %c0_i32_0 = arith.constant 0 : i32
    return %arg0, %c0_i32 : i32, i32
  }
  func.func @transform_2(%arg0: i32, %arg1: i32) -> (i32, i32) {
    %c0_i32 = arith.constant 0 : i32
    %c0_i32_0 = arith.constant 0 : i32
    return %c0_i32, %arg1 : i32, i32
  }
  func.func @transform_3(%arg0: i32, %arg1: i32) -> (i32, i32) {
    %c0_i32 = arith.constant 0 : i32
    %c0_i32_0 = arith.constant 0 : i32
    return %c0_i32, %arg1 : i32, i32
  }
  func.func @transform_4(%arg0: i32, %arg1: i32) -> (i32, i32) {
    %c0_i32 = arith.constant 0 : i32
    %c0_i32_0 = arith.constant 0 : i32
    return %c0_i32, %arg0 : i32, i32
  }
}

</mosaic_0001>

<llo_original>
// kernel: tpu_custom_call.1
$region0: #{tpu_custom_call.1}
  #allocation0 [shape = 'u32[]', space=smem, size = 0x4, offset = 0x4, fixed_abs, tag = 'smem constant byte address 0x4 - core index']
  #allocation1 [shape = 'u32[72,128]{1,0:T(1,128)}', space=vmem, size = 0x9000, scoped, tag = 'internal scratch']
  #allocation2 [shape = 'f32[128,8]{1,0:T(8,128)}', space=vmem, size = 0x10000, scoped, tag = 'scratch operand']
  #allocation3 [shape = 'f32[128,8]{1,0:T(8,128)}', space=vmem, size = 0x10000, scoped, tag = 'scratch operand']
  #allocation4 [shape = 'f32[128,1]{1,0:T(8,128)}', space=vmem, size = 0x10000, scoped, tag = 'scratch operand']
  #allocation5 [shape = 'f32[128,1]{1,0:T(8,128)}', space=vmem, size = 0x10000, scoped, tag = 'scratch operand']
  %s0 = inlined_call_operand.vmem [shape: f32[256,128], index: 0, kind: input, shape index: {}]
  %s1 = inlined_call_operand.vmem [shape: s32[256,1], index: 1, kind: input, shape index: {}]
  %s2 = inlined_call_operand.hbm [shape: f32[128,384], index: 2, kind: input, shape index: {}]
  %s3 = inlined_call_operand.vmem [shape: f32[1,384], index: 3, kind: input, shape index: {}]
  %s4 = inlined_call_operand.hbm [shape: f32[1,256], index: 4, kind: output, shape index: {}]
  %s5 = sld [smem:[#allocation0]]
  $region61: #{tpu_custom_call.1} parent=0
    _
  %s7 = ssub.s32 1, %s5
  %s8 = scalar_select 0, %s7, %s5
  $region1: #{tpu_custom_call.1} parent=0
    #allocation6 [shape = 'u8[131072]{0}', space=vmem, size = 0x20000, scoped, tag = 'input window, operand 2']
    #allocation7 [shape = 's32[2]{0}', space=sflag, size = 0x8, scoped, tag = 'scoped memory for tpu_custom_call.1']
    #allocation8 [shape = 's32[2]{0}', space=sflag, size = 0x8, scoped, tag = 'scoped memory for tpu_custom_call.1']
    #allocation9 [shape = 'u8[1024]{0}', space=vmem, size = 0x400, scoped, tag = 'output window, operand 0']
    %9 = vsyncpa [#allocation7], 0
    %s10 = scalar_lea.sflag [#allocation7], 1
    %11 = vsyncpa %s10, 0
    %12 = vsyncpa [#allocation8], 0
    %s13 = scalar_lea.sflag [#allocation8], 1
    %14 = vsyncpa %s13, 0
    loop: start=0, step=1, limit=8
    $region2: #{tpu_custom_call.1} parent=1 // loop_pre_header
      _
    $region3: #{tpu_custom_call.1} parent=1 // loop_header
      %s16 = sphi 0, %s20
      %p17 = scmp.ge.s32.totalorder %s16, 8
      %s23 = sphi 0, %s35
      %s24 = sphi 0, %s31
      %s25 = sphi 0, %s23
      %s26 = sphi 0, %s24
      %s27 = sphi 0, %s25
      %s28 = sphi 0, %s26
      %s38 = sphi 0, %s40
      %s41 = sphi 0, %s38
      %s42 = sphi 0, %s41
      %s58 = sphi 0, %s42
      %s64 = sphi 0, %s66
      %s67 = sphi 0, %s64
      %s68 = sphi 0, %s67
      %s84 = sphi 0, %s68
      %s90 = sphi 0, %s92
      %s93 = sphi 0, %s90
      %s94 = sphi 0, %s93
      %s110 = sphi 0, %s94
      %s116 = sphi 0, %s118
      %s119 = sphi 0, %s116
      %s120 = sphi 0, %s119
      %s136 = sphi 0, %s120
      %s142 = sphi 0, %s144
      %s145 = sphi 0, %s142
      %s146 = sphi 0, %s145
      %s162 = sphi 0, %s146
    $region4: #{tpu_custom_call.1} parent=1 // loop_header_branch
      %19 = sbr.rel (%p17) target = $region8
    $region5: #{tpu_custom_call.1} parent=1 // loop_body
      %s21 = ssub.s32 %s16, 1
      %s22 = ssub.s32 %s16, 2
      %s29 = sadd.s32 1, %s24
      %p30 = scmp.ge.s32.totalorder %s29, 3
      %s31 = scalar_select %p30, 0, %s29
      %s32 = sadd.s32 1, %s23
      %s33 = scalar_select %p30, %s32, %s23
      %p34 = scmp.ge.s32.totalorder %s33, 2
      %s35 = scalar_select %p34, 0, %s33
      %s36 = ssub.s32 %s23, %s35
      %p37 = scmp.eq.s32.totalorder %s36, 0
      %s39 = sadd.s32 %s38, 1
      %s40 = scalar_select %p37, %s38, %s39
      %p43 = pneg %p37
      %p44 = scmp.eq.s32.totalorder %s16, 5
      %p45 = por %p43, %p44
      %p46 = scmp.ne.s32.totalorder %s38, %s41
      %p47 = scmp.eq.s32.totalorder %s16, 0
      %p48 = por %p46, %p47
      %p49 = scmp.ne.s32.totalorder %s38, %s41
      %p50 = scmp.eq.s32.totalorder %s21, 5
      %p51 = por %p49, %p50
      %p52 = scmp.ne.s32.totalorder %s41, %s42
      %p53 = scmp.eq.s32.totalorder %s21, 0
      %p54 = por %p52, %p53
      %p55 = scmp.ne.s32.totalorder %s41, %s42
      %p56 = scmp.eq.s32.totalorder %s22, 5
      %p57 = por %p55, %p56
      %p59 = scmp.ne.s32.totalorder %s42, %s58
      %p60 = scmp.eq.s32.totalorder %s22, 0
      %p61 = por %p59, %p60
      %s62 = ssub.s32 %s23, %s35
      %p63 = scmp.eq.s32.totalorder %s62, 0
      %s65 = sadd.s32 %s64, 1
      %s66 = scalar_select %p63, %s64, %s65
      %p69 = pneg %p63
      %p70 = scmp.eq.s32.totalorder %s16, 5
      %p71 = por %p69, %p70
      %p72 = scmp.ne.s32.totalorder %s64, %s67
      %p73 = scmp.eq.s32.totalorder %s16, 0
      %p74 = por %p72, %p73
      %p75 = scmp.ne.s32.totalorder %s64, %s67
      %p76 = scmp.eq.s32.totalorder %s21, 5
      %p77 = por %p75, %p76
      %p78 = scmp.ne.s32.totalorder %s67, %s68
      %p79 = scmp.eq.s32.totalorder %s21, 0
      %p80 = por %p78, %p79
      %p81 = scmp.ne.s32.totalorder %s67, %s68
      %p82 = scmp.eq.s32.totalorder %s22, 5
      %p83 = por %p81, %p82
      %p85 = scmp.ne.s32.totalorder %s68, %s84
      %p86 = scmp.eq.s32.totalorder %s22, 0
      %p87 = por %p85, %p86
      %s88 = ssub.s32 %s24, %s31
      %p89 = scmp.eq.s32.totalorder %s88, 0
      %s91 = sadd.s32 %s90, 1
      %s92 = scalar_select %p89, %s90, %s91
      %p95 = pneg %p89
      %p96 = scmp.eq.s32.totalorder %s16, 5
      %p97 = por %p95, %p96
      %p98 = scmp.ne.s32.totalorder %s90, %s93
      %p99 = scmp.eq.s32.totalorder %s16, 0
      %p100 = por %p98, %p99
      %p101 = scmp.ne.s32.totalorder %s90, %s93
      %p102 = scmp.eq.s32.totalorder %s21, 5
      %p103 = por %p101, %p102
      %p104 = scmp.ne.s32.totalorder %s93, %s94
      %p105 = scmp.eq.s32.totalorder %s21, 0
      %p106 = por %p104, %p105
      %p107 = scmp.ne.s32.totalorder %s93, %s94
      %p108 = scmp.eq.s32.totalorder %s22, 5
      %p109 = por %p107, %p108
      %p111 = scmp.ne.s32.totalorder %s94, %s110
      %p112 = scmp.eq.s32.totalorder %s22, 0
      %p113 = por %p111, %p112
      %s114 = ssub.s32 %s24, %s31
      %p115 = scmp.eq.s32.totalorder %s114, 0
      %s117 = sadd.s32 %s116, 1
      %s118 = scalar_select %p115, %s116, %s117
      %p121 = pneg %p115
      %p122 = scmp.eq.s32.totalorder %s16, 5
      %p123 = por %p121, %p122
      %p124 = scmp.ne.s32.totalorder %s116, %s119
      %p125 = scmp.eq.s32.totalorder %s16, 0
      %p126 = por %p124, %p125
      %p127 = scmp.ne.s32.totalorder %s116, %s119
      %p128 = scmp.eq.s32.totalorder %s21, 5
      %p129 = por %p127, %p128
      %p130 = scmp.ne.s32.totalorder %s119, %s120
      %p131 = scmp.eq.s32.totalorder %s21, 0
      %p132 = por %p130, %p131
      %p133 = scmp.ne.s32.totalorder %s119, %s120
      %p134 = scmp.eq.s32.totalorder %s22, 5
      %p135 = por %p133, %p134
      %p137 = scmp.ne.s32.totalorder %s120, %s136
      %p138 = scmp.eq.s32.totalorder %s22, 0
      %p139 = por %p137, %p138
      %s140 = ssub.s32 %s23, %s35
      %p141 = scmp.eq.s32.totalorder %s140, 0
      %s143 = sadd.s32 %s142, 1
      %s144 = scalar_select %p141, %s142, %s143
      %p147 = pneg %p141
      %p148 = scmp.eq.s32.totalorder %s16, 5
      %p149 = por %p147, %p148
      %p150 = scmp.ne.s32.totalorder %s142, %s145
      %p151 = scmp.eq.s32.totalorder %s16, 0
      %p152 = por %p150, %p151
      %p153 = scmp.ne.s32.totalorder %s142, %s145
      %p154 = scmp.eq.s32.totalorder %s21, 5
      %p155 = por %p153, %p154
      %p156 = scmp.ne.s32.totalorder %s145, %s146
      %p157 = scmp.eq.s32.totalorder %s21, 0
      %p158 = por %p156, %p157
      %p159 = scmp.ne.s32.totalorder %s145, %s146
      %p160 = scmp.eq.s32.totalorder %s22, 5
      %p161 = por %p159, %p160
      %p163 = scmp.ne.s32.totalorder %s146, %s162
      %p164 = scmp.eq.s32.totalorder %s22, 0
      %p165 = por %p163, %p164
      %p166 = scmp.le.s32.totalorder 1, %s16
      %p167 = scmp.lt.s32.totalorder %s16, 7
      %p168 = pnand %p166, %p167
      %p169 = pneg %p168
      // Predicated region
      $region9: #{tpu_custom_call.1} parent=5 // pred_check
        _
      $region10: #{tpu_custom_call.1} parent=5 // pred_check_branch
        %171 = sbr.rel (%p168) target = $region12
      $region11: #{tpu_custom_call.1} parent=5 // pred_region
        %s172 = ssub.s32 %s16, 1
      $region12: #{tpu_custom_call.1} parent=5 // pred_fallthru
        _
      %p173 = scmp.lt.s32.totalorder %s16, 6
      // Predicated region
      $region13: #{tpu_custom_call.1} parent=5 // pred_check
        %p174 = pneg %p173
      $region14: #{tpu_custom_call.1} parent=5 // pred_check_branch
        %176 = sbr.rel (%p174) target = $region16
      $region15: #{tpu_custom_call.1} parent=5 // pred_region
        // Predicated region
        $region17: #{tpu_custom_call.1} parent=15 // pred_check
          %p177 = pneg %p48
        $region18: #{tpu_custom_call.1} parent=15 // pred_check_branch
          %179 = sbr.rel (%p177) target = $region20
        $region19: #{tpu_custom_call.1} parent=15 // pred_region
          %s180 = smul.u32 16, %s23
          %p181 = scmp.lt.s32.totalorder %s180, 31
          %s182 = scalar_select %p181, %s180, 31
          %s183 = smul.addr %s182, 8
          %s184 = scalar_lea.vmem %s0, %s183
          %s185 = smul.u32 16, %s23
        $region20: #{tpu_custom_call.1} parent=15 // pred_fallthru
          _
        // Predicated region
        $region21: #{tpu_custom_call.1} parent=15 // pred_check
          %p186 = pneg %p74
        $region22: #{tpu_custom_call.1} parent=15 // pred_check_branch
          %188 = sbr.rel (%p186) target = $region24
        $region23: #{tpu_custom_call.1} parent=15 // pred_region
          %s189 = smul.u32 16, %s23
          %p190 = scmp.lt.s32.totalorder %s189, 31
          %s191 = scalar_select %p190, %s189, 31
          %s192 = smul.addr %s191, 8
          %s193 = scalar_lea.vmem %s1, %s192
          %s194 = smul.u32 16, %s23
        $region24: #{tpu_custom_call.1} parent=15 // pred_fallthru
          _
        // Predicated region
        $region25: #{tpu_custom_call.1} parent=15 // pred_check
          %p195 = pneg %p100
        $region26: #{tpu_custom_call.1} parent=15 // pred_check_branch
          %197 = sbr.rel (%p195) target = $region28
        $region27: #{tpu_custom_call.1} parent=15 // pred_region
          %s198 = sand.u32 %s90, 1
          %s199 = scalar_lea.sflag [#allocation7], %s198
          %s200 = sand.u32 %s90, 1
          %s201 = smul.addr %s200, 128
          %s202 = scalar_lea.vmem [#allocation6], %s201
          %204 = vsyncadd %s199, 0
          %s205 = smul.addr %s24, 8
          %s206 = scalar_lea.hbm %s2, %s205
          %s207 = sshll.u32 %s206, 4
          %s208 = int_to_ptr.hbm [resolvable:$true] %s207
          %s209 = sshll.u32 %s202, 4
          %s210 = int_to_ptr.vmem [resolvable:$true] %s209
          %215 = dma.hbm_to_vmem [thread:$0]  %s208, 2048, %s210, %s199, 384, 128, 8
        $region28: #{tpu_custom_call.1} parent=15 // pred_fallthru
          _
        // Predicated region
        $region29: #{tpu_custom_call.1} parent=15 // pred_check
          %p216 = pneg %p126
        $region30: #{tpu_custom_call.1} parent=15 // pred_check_branch
          %218 = sbr.rel (%p216) target = $region32
        $region31: #{tpu_custom_call.1} parent=15 // pred_region
          %p219 = scmp.lt.s32.totalorder %s24, 2
          %s220 = scalar_select %p219, %s24, 2
          %s221 = scalar_lea.vmem %s3, %s220
        $region32: #{tpu_custom_call.1} parent=15 // pred_fallthru
          _
      $region16: #{tpu_custom_call.1} parent=5 // pred_fallthru
        _
      %p222 = scmp.le.s32.totalorder 1, %s16
      %p223 = scmp.lt.s32.totalorder %s16, 7
      %p224 = pnand %p222, %p223
      %p225 = pneg %p224
      // Predicated region
      $region33: #{tpu_custom_call.1} parent=5 // pred_check
        _
      $region34: #{tpu_custom_call.1} parent=5 // pred_check_branch
        %227 = sbr.rel (%p224) target = $region36
      $region35: #{tpu_custom_call.1} parent=5 // pred_region
        %s228 = ssub.s32 %s16, 1
        %s229 = sand.u32 %s93, 1
        %s230 = scalar_lea.sflag [#allocation7], %s229
        %s231 = sand.u32 %s93, 1
        %s232 = smul.addr %s231, 128
        %s233 = scalar_lea.vmem [#allocation6], %s232
        // Predicated region
        $region37: #{tpu_custom_call.1} parent=35 // pred_check
          %p234 = pneg %p106
        $region38: #{tpu_custom_call.1} parent=35 // pred_check_branch
          %236 = sbr.rel (%p234) target = $region40
        $region39: #{tpu_custom_call.1} parent=35 // pred_region
          %238 = dma.done %s230, 2048
        $region40: #{tpu_custom_call.1} parent=35 // pred_fallthru
          _
        %s239 = smul.u32 16, %s25
        %p240 = scmp.lt.s32.totalorder %s239, 31
        %s241 = scalar_select %p240, %s239, 31
        %s242 = smul.addr %s241, 8
        %s243 = scalar_lea.vmem %s0, %s242
        %p244 = pneg %p54
        %p245 = pneg %p51
        %s246 = smul.u32 16, %s25
        %p247 = scmp.lt.s32.totalorder %s246, 31
        %s248 = scalar_select %p247, %s246, 31
        %s249 = smul.addr %s248, 8
        %s250 = scalar_lea.vmem %s1, %s249
        %p251 = pneg %p80
        %p252 = pneg %p77
        %s253 = sand.u32 %s93, 1
        %s254 = scalar_lea.sflag [#allocation7], %s253
        %s255 = sand.u32 %s93, 1
        %s256 = smul.addr %s255, 128
        %s257 = scalar_lea.vmem [#allocation6], %s256
        %p258 = pneg %p106
        %p259 = pneg %p103
        %p260 = scmp.lt.s32.totalorder %s26, 2
        %s261 = scalar_select %p260, %s26, 2
        %s262 = scalar_lea.vmem %s3, %s261
        %p263 = pneg %p132
        %p264 = pneg %p129
        %p265 = pneg %p158
        %p266 = pneg %p155
        %s267 = sand.u32 %s145, 1
        %s268 = scalar_lea.sflag [#allocation8], %s267
        %s269 = sand.u32 %s145, 1
        %s270 = scalar_lea.vmem [#allocation9], %s269
        %s271 = smul.u32 16, %s25
        %p272 = scmp.lt.s32.totalorder %s271, 31
        %s273 = scalar_select %p272, %s271, 31
        %s274 = smul.addr %s273, 8
        %s275 = scalar_lea.vmem %s0, %s274
        %s276 = smul.u32 16, %s25
        %s277 = smul.u32 16, %s25
        %p278 = scmp.lt.s32.totalorder %s277, 31
        %s279 = scalar_select %p278, %s277, 31
        %s280 = smul.addr %s279, 8
        %s281 = scalar_lea.vmem %s1, %s280
        %s282 = smul.u32 16, %s25
        %p283 = scmp.lt.s32.totalorder %s26, 2
        %s284 = scalar_select %p283, %s26, 2
        %s285 = scalar_lea.vmem %s3, %s284
        %p286 = scmp.eq.s32.totalorder %s26, 0
        // Predicated region
        $region41: #{tpu_custom_call.1} parent=35 // pred_check
          %p287 = pneg %p286
        $region42: #{tpu_custom_call.1} parent=35 // pred_check_branch
          %289 = sbr.rel (%p287) target = $region44
        $region43: #{tpu_custom_call.1} parent=35 // pred_region
          %vm290 = vcmask 64512
          %291 = vst.msk [vmem:[#allocation2] sm:$0xff] %vm290, -1e+30
          %292 = vst.msk [vmem:[#allocation2 + $0x8] sm:$0xff] %vm290, -1e+30
          %293 = vst.msk [vmem:[#allocation2 + $0x10] sm:$0xff] %vm290, -1e+30
          %294 = vst.msk [vmem:[#allocation2 + $0x18] sm:$0xff] %vm290, -1e+30
          %295 = vst.msk [vmem:[#allocation2 + $0x20] sm:$0xff] %vm290, -1e+30
          %296 = vst.msk [vmem:[#allocation2 + $0x28] sm:$0xff] %vm290, -1e+30
          %297 = vst.msk [vmem:[#allocation2 + $0x30] sm:$0xff] %vm290, -1e+30
          %298 = vst.msk [vmem:[#allocation2 + $0x38] sm:$0xff] %vm290, -1e+30
          %299 = vst.msk [vmem:[#allocation2 + $0x40] sm:$0xff] %vm290, -1e+30
          %300 = vst.msk [vmem:[#allocation2 + $0x48] sm:$0xff] %vm290, -1e+30
          %301 = vst.msk [vmem:[#allocation2 + $0x50] sm:$0xff] %vm290, -1e+30
          %302 = vst.msk [vmem:[#allocation2 + $0x58] sm:$0xff] %vm290, -1e+30
          %303 = vst.msk [vmem:[#allocation2 + $0x60] sm:$0xff] %vm290, -1e+30
          %304 = vst.msk [vmem:[#allocation2 + $0x68] sm:$0xff] %vm290, -1e+30
          %305 = vst.msk [vmem:[#allocation2 + $0x70] sm:$0xff] %vm290, -1e+30
          %306 = vst.msk [vmem:[#allocation2 + $0x78] sm:$0xff] %vm290, -1e+30
          %307 = vst.msk [vmem:[#allocation3] sm:$0xff] %vm290, 0.0
          %308 = vst.msk [vmem:[#allocation3 + $0x8] sm:$0xff] %vm290, 0.0
          %309 = vst.msk [vmem:[#allocation3 + $0x10] sm:$0xff] %vm290, 0.0
          %310 = vst.msk [vmem:[#allocation3 + $0x18] sm:$0xff] %vm290, 0.0
          %311 = vst.msk [vmem:[#allocation3 + $0x20] sm:$0xff] %vm290, 0.0
          %312 = vst.msk [vmem:[#allocation3 + $0x28] sm:$0xff] %vm290, 0.0
          %313 = vst.msk [vmem:[#allocation3 + $0x30] sm:$0xff] %vm290, 0.0
          %314 = vst.msk [vmem:[#allocation3 + $0x38] sm:$0xff] %vm290, 0.0
          %315 = vst.msk [vmem:[#allocation3 + $0x40] sm:$0xff] %vm290, 0.0
          %316 = vst.msk [vmem:[#allocation3 + $0x48] sm:$0xff] %vm290, 0.0
          %317 = vst.msk [vmem:[#allocation3 + $0x50] sm:$0xff] %vm290, 0.0
          %318 = vst.msk [vmem:[#allocation3 + $0x58] sm:$0xff] %vm290, 0.0
          %319 = vst.msk [vmem:[#allocation3 + $0x60] sm:$0xff] %vm290, 0.0
          %320 = vst.msk [vmem:[#allocation3 + $0x68] sm:$0xff] %vm290, 0.0
          %321 = vst.msk [vmem:[#allocation3 + $0x70] sm:$0xff] %vm290, 0.0
          %322 = vst.msk [vmem:[#allocation3 + $0x78] sm:$0xff] %vm290, 0.0
          %vm323 = vcmask 7168
          %324 = vst.msk [vmem:[#allocation4] sm:$0xff] %vm323, 0.0
          %325 = vst.msk [vmem:[#allocation4 + $0x8] sm:$0xff] %vm323, 0.0
          %326 = vst.msk [vmem:[#allocation4 + $0x10] sm:$0xff] %vm323, 0.0
          %327 = vst.msk [vmem:[#allocation4 + $0x18] sm:$0xff] %vm323, 0.0
          %328 = vst.msk [vmem:[#allocation4 + $0x20] sm:$0xff] %vm323, 0.0
          %329 = vst.msk [vmem:[#allocation4 + $0x28] sm:$0xff] %vm323, 0.0
          %330 = vst.msk [vmem:[#allocation4 + $0x30] sm:$0xff] %vm323, 0.0
          %331 = vst.msk [vmem:[#allocation4 + $0x38] sm:$0xff] %vm323, 0.0
          %332 = vst.msk [vmem:[#allocation4 + $0x40] sm:$0xff] %vm323, 0.0
          %333 = vst.msk [vmem:[#allocation4 + $0x48] sm:$0xff] %vm323, 0.0
          %334 = vst.msk [vmem:[#allocation4 + $0x50] sm:$0xff] %vm323, 0.0
          %335 = vst.msk [vmem:[#allocation4 + $0x58] sm:$0xff] %vm323, 0.0
          %336 = vst.msk [vmem:[#allocation4 + $0x60] sm:$0xff] %vm323, 0.0
          %337 = vst.msk [vmem:[#allocation4 + $0x68] sm:$0xff] %vm323, 0.0
          %338 = vst.msk [vmem:[#allocation4 + $0x70] sm:$0xff] %vm323, 0.0
          %339 = vst.msk [vmem:[#allocation4 + $0x78] sm:$0xff] %vm323, 0.0
          %340 = vst.msk [vmem:[#allocation5] sm:$0xff] %vm323, 0.0
          %341 = vst.msk [vmem:[#allocation5 + $0x8] sm:$0xff] %vm323, 0.0
          %342 = vst.msk [vmem:[#allocation5 + $0x10] sm:$0xff] %vm323, 0.0
          %343 = vst.msk [vmem:[#allocation5 + $0x18] sm:$0xff] %vm323, 0.0
          %344 = vst.msk [vmem:[#allocation5 + $0x20] sm:$0xff] %vm323, 0.0
          %345 = vst.msk [vmem:[#allocation5 + $0x28] sm:$0xff] %vm323, 0.0
          %346 = vst.msk [vmem:[#allocation5 + $0x30] sm:$0xff] %vm323, 0.0
          %347 = vst.msk [vmem:[#allocation5 + $0x38] sm:$0xff] %vm323, 0.0
          %348 = vst.msk [vmem:[#allocation5 + $0x40] sm:$0xff] %vm323, 0.0
          %349 = vst.msk [vmem:[#allocation5 + $0x48] sm:$0xff] %vm323, 0.0
          %350 = vst.msk [vmem:[#allocation5 + $0x50] sm:$0xff] %vm323, 0.0
          %351 = vst.msk [vmem:[#allocation5 + $0x58] sm:$0xff] %vm323, 0.0
          %352 = vst.msk [vmem:[#allocation5 + $0x60] sm:$0xff] %vm323, 0.0
          %353 = vst.msk [vmem:[#allocation5 + $0x68] sm:$0xff] %vm323, 0.0
          %354 = vst.msk [vmem:[#allocation5 + $0x70] sm:$0xff] %vm323, 0.0
          %355 = vst.msk [vmem:[#allocation5 + $0x78] sm:$0xff] %vm323, 0.0
        $region44: #{tpu_custom_call.1} parent=35 // pred_fallthru
          _
        %v356 = vld [vmem:[%s275] sm:$0xff]
        %v357 = vld [vmem:[%s275 + $0x8] sm:$0xff]
        %v358 = vld [vmem:[%s275 + $0x10] sm:$0xff]
        %v359 = vld [vmem:[%s275 + $0x18] sm:$0xff]
        %v360 = vld [vmem:[%s275 + $0x20] sm:$0xff]
        %v361 = vld [vmem:[%s275 + $0x28] sm:$0xff]
        %v362 = vld [vmem:[%s275 + $0x30] sm:$0xff]
        %v363 = vld [vmem:[%s275 + $0x38] sm:$0xff]
        %v364 = vld [vmem:[%s275 + $0x40] sm:$0xff]
        %v365 = vld [vmem:[%s275 + $0x48] sm:$0xff]
        %v366 = vld [vmem:[%s275 + $0x50] sm:$0xff]
        %v367 = vld [vmem:[%s275 + $0x58] sm:$0xff]
        %v368 = vld [vmem:[%s275 + $0x60] sm:$0xff]
        %v369 = vld [vmem:[%s275 + $0x68] sm:$0xff]
        %v370 = vld [vmem:[%s275 + $0x70] sm:$0xff]
        %v371 = vld [vmem:[%s275 + $0x78] sm:$0xff]
        %v372 = vld [vmem:[%s233] sm:$0xff]
        %v373 = vld [vmem:[%s233 + $0x8] sm:$0xff]
        %v374 = vld [vmem:[%s233 + $0x10] sm:$0xff]
        %v375 = vld [vmem:[%s233 + $0x18] sm:$0xff]
        %v376 = vld [vmem:[%s233 + $0x20] sm:$0xff]
        %v377 = vld [vmem:[%s233 + $0x28] sm:$0xff]
        %v378 = vld [vmem:[%s233 + $0x30] sm:$0xff]
        %v379 = vld [vmem:[%s233 + $0x38] sm:$0xff]
        %v380 = vld [vmem:[%s233 + $0x40] sm:$0xff]
        %v381 = vld [vmem:[%s233 + $0x48] sm:$0xff]
        %v382 = vld [vmem:[%s233 + $0x50] sm:$0xff]
        %v383 = vld [vmem:[%s233 + $0x58] sm:$0xff]
        %v384 = vld [vmem:[%s233 + $0x60] sm:$0xff]
        %v385 = vld [vmem:[%s233 + $0x68] sm:$0xff]
        %v386 = vld [vmem:[%s233 + $0x70] sm:$0xff]
        %v387 = vld [vmem:[%s233 + $0x78] sm:$0xff]
        %v388 = vld [vmem:[%s285] sm:$0x1]
        %v390 = vperm.slane %v388, 0
        %392 = vmatpush.msra.mxu0 %v387
        %393 = vmatpush.msra.mxu0 %v386
        %394 = vmatpush.msra.mxu0 %v385
        %395 = vmatpush.msra.mxu0 %v384
        %396 = vmatpush.msra.mxu0 %v383
        %397 = vmatpush.msra.mxu0 %v382
        %398 = vmatpush.msra.mxu0 %v381
        %399 = vmatpush.msra.mxu0 %v380
        %400 = vmatpush.msra.mxu0 %v379
        %401 = vmatpush.msra.mxu0 %v378
        %402 = vmatpush.msra.mxu0 %v377
        %403 = vmatpush.msra.mxu0 %v376
        %404 = vmatpush.msra.mxu0 %v375
        %405 = vmatpush.msra.mxu0 %v374
        %406 = vmatpush.msra.mxu0 %v373
        %407 = vmatpush.msra.mxu0 %v372
        %408 = vmatmul.f32.gmra.mxu0 %v356
        %v409 = vpop.f32.mrf.mxu0
        %v410 = vadd.f32 %v390, %v409
        %411 = vmatmul.f32.gmra.mxu0 %v357
        %v412 = vpop.f32.mrf.mxu0
        %v413 = vadd.f32 %v390, %v412
        %414 = vmatmul.f32.gmra.mxu0 %v358
        %v415 = vpop.f32.mrf.mxu0
        %v416 = vadd.f32 %v390, %v415
        %417 = vmatmul.f32.gmra.mxu0 %v359
        %v418 = vpop.f32.mrf.mxu0
        %v419 = vadd.f32 %v390, %v418
        %420 = vmatmul.f32.gmra.mxu0 %v360
        %v421 = vpop.f32.mrf.mxu0
        %v422 = vadd.f32 %v390, %v421
        %423 = vmatmul.f32.gmra.mxu0 %v361
        %v424 = vpop.f32.mrf.mxu0
        %v425 = vadd.f32 %v390, %v424
        %426 = vmatmul.f32.gmra.mxu0 %v362
        %v427 = vpop.f32.mrf.mxu0
        %v428 = vadd.f32 %v390, %v427
        %429 = vmatmul.f32.gmra.mxu0 %v363
        %v430 = vpop.f32.mrf.mxu0
        %v431 = vadd.f32 %v390, %v430
        %432 = vmatmul.f32.gmra.mxu0 %v364
        %v433 = vpop.f32.mrf.mxu0
        %v434 = vadd.f32 %v390, %v433
        %435 = vmatmul.f32.gmra.mxu0 %v365
        %v436 = vpop.f32.mrf.mxu0
        %v437 = vadd.f32 %v390, %v436
        %438 = vmatmul.f32.gmra.mxu0 %v366
        %v439 = vpop.f32.mrf.mxu0
        %v440 = vadd.f32 %v390, %v439
        %441 = vmatmul.f32.gmra.mxu0 %v367
        %v442 = vpop.f32.mrf.mxu0
        %v443 = vadd.f32 %v390, %v442
        %444 = vmatmul.f32.gmra.mxu0 %v368
        %v445 = vpop.f32.mrf.mxu0
        %v446 = vadd.f32 %v390, %v445
        %447 = vmatmul.f32.gmra.mxu0 %v369
        %v448 = vpop.f32.mrf.mxu0
        %v449 = vadd.f32 %v390, %v448
        %450 = vmatmul.f32.gmra.mxu0 %v370
        %v451 = vpop.f32.mrf.mxu0
        %v452 = vadd.f32 %v390, %v451
        %453 = vmatmul.f32.gmra.mxu0 %v371
        %v454 = vpop.f32.mrf.mxu0
        %v455 = vadd.f32 %v390, %v454
        %456 = vdwg.mxu0
        %p457 = scmp.ge.s32.totalorder %s26, 1
        %s458 = scalar_select %p457, 1, 0
        %p459 = scmp.ge.s32.totalorder %s26, 2
        %s460 = scalar_select %p459, 2, %s458
        %p461 = scmp.eq.s32.totalorder %s460, 0
        %v462 = vld [vmem:[%s281] sm:$0xff]
        %v463 = vld [vmem:[%s281 + $0x8] sm:$0xff]
        %v464 = vld [vmem:[%s281 + $0x10] sm:$0xff]
        %v465 = vld [vmem:[%s281 + $0x18] sm:$0xff]
        %v466 = vld [vmem:[%s281 + $0x20] sm:$0xff]
        %v467 = vld [vmem:[%s281 + $0x28] sm:$0xff]
        %v468 = vld [vmem:[%s281 + $0x30] sm:$0xff]
        %v469 = vld [vmem:[%s281 + $0x38] sm:$0xff]
        %v470 = vld [vmem:[%s281 + $0x40] sm:$0xff]
        %v471 = vld [vmem:[%s281 + $0x48] sm:$0xff]
        %v472 = vld [vmem:[%s281 + $0x50] sm:$0xff]
        %v473 = vld [vmem:[%s281 + $0x58] sm:$0xff]
        %v474 = vld [vmem:[%s281 + $0x60] sm:$0xff]
        %v475 = vld [vmem:[%s281 + $0x68] sm:$0xff]
        %v476 = vld [vmem:[%s281 + $0x70] sm:$0xff]
        %v477 = vld [vmem:[%s281 + $0x78] sm:$0xff]
        %vm478 = vcmp.ge.s32.totalorder %v462, 64
        %vm479 = vcmp.ge.s32.totalorder %v463, 64
        %vm480 = vcmp.ge.s32.totalorder %v464, 64
        %vm481 = vcmp.ge.s32.totalorder %v465, 64
        %vm482 = vcmp.ge.s32.totalorder %v466, 64
        %vm483 = vcmp.ge.s32.totalorder %v467, 64
        %vm484 = vcmp.ge.s32.totalorder %v468, 64
        %vm485 = vcmp.ge.s32.totalorder %v469, 64
        %vm486 = vcmp.ge.s32.totalorder %v470, 64
        %vm487 = vcmp.ge.s32.totalorder %v471, 64
        %vm488 = vcmp.ge.s32.totalorder %v472, 64
        %vm489 = vcmp.ge.s32.totalorder %v473, 64
        %vm490 = vcmp.ge.s32.totalorder %v474, 64
        %vm491 = vcmp.ge.s32.totalorder %v475, 64
        %vm492 = vcmp.ge.s32.totalorder %v476, 64
        %vm493 = vcmp.ge.s32.totalorder %v477, 64
        %vm494 = vcmp.lt.s32.totalorder %v462, 112
        %vm495 = vcmp.lt.s32.totalorder %v463, 112
        %vm496 = vcmp.lt.s32.totalorder %v464, 112
        %vm497 = vcmp.lt.s32.totalorder %v465, 112
        %vm498 = vcmp.lt.s32.totalorder %v466, 112
        %vm499 = vcmp.lt.s32.totalorder %v467, 112
        %vm500 = vcmp.lt.s32.totalorder %v468, 112
        %vm501 = vcmp.lt.s32.totalorder %v469, 112
        %vm502 = vcmp.lt.s32.totalorder %v470, 112
        %vm503 = vcmp.lt.s32.totalorder %v471, 112
        %vm504 = vcmp.lt.s32.totalorder %v472, 112
        %vm505 = vcmp.lt.s32.totalorder %v473, 112
        %vm506 = vcmp.lt.s32.totalorder %v474, 112
        %vm507 = vcmp.lt.s32.totalorder %v475, 112
        %vm508 = vcmp.lt.s32.totalorder %v476, 112
        %vm509 = vcmp.lt.s32.totalorder %v477, 112
        %vm510 = vmand %vm478, %vm494
        %vm511 = vmand %vm479, %vm495
        %vm512 = vmand %vm480, %vm496
        %vm513 = vmand %vm481, %vm497
        %vm514 = vmand %vm482, %vm498
        %vm515 = vmand %vm483, %vm499
        %vm516 = vmand %vm484, %vm500
        %vm517 = vmand %vm485, %vm501
        %vm518 = vmand %vm486, %vm502
        %vm519 = vmand %vm487, %vm503
        %vm520 = vmand %vm488, %vm504
        %vm521 = vmand %vm489, %vm505
        %vm522 = vmand %vm490, %vm506
        %vm523 = vmand %vm491, %vm507
        %vm524 = vmand %vm492, %vm508
        %vm525 = vmand %vm493, %vm509
        %v526 = vsel %vm510, 1, 0
        %v527 = vsel %vm511, 1, 0
        %v528 = vsel %vm512, 1, 0
        %v529 = vsel %vm513, 1, 0
        %v530 = vsel %vm514, 1, 0
        %v531 = vsel %vm515, 1, 0
        %v532 = vsel %vm516, 1, 0
        %v533 = vsel %vm517, 1, 0
        %v534 = vsel %vm518, 1, 0
        %v535 = vsel %vm519, 1, 0
        %v536 = vsel %vm520, 1, 0
        %v537 = vsel %vm521, 1, 0
        %v538 = vsel %vm522, 1, 0
        %v539 = vsel %vm523, 1, 0
        %v540 = vsel %vm524, 1, 0
        %v541 = vsel %vm525, 1, 0
        %v542 = vsel %vm510, 64, %v462
        %v543 = vsel %vm511, 64, %v463
        %v544 = vsel %vm512, 64, %v464
        %v545 = vsel %vm513, 64, %v465
        %v546 = vsel %vm514, 64, %v466
        %v547 = vsel %vm515, 64, %v467
        %v548 = vsel %vm516, 64, %v468
        %v549 = vsel %vm517, 64, %v469
        %v550 = vsel %vm518, 64, %v470
        %v551 = vsel %vm519, 64, %v471
        %v552 = vsel %vm520, 64, %v472
        %v553 = vsel %vm521, 64, %v473
        %v554 = vsel %vm522, 64, %v474
        %v555 = vsel %vm523, 64, %v475
        %v556 = vsel %vm524, 64, %v476
        %v557 = vsel %vm525, 64, %v477
        %v558 = vsub.s32 %v462, 64
        %v559 = vsub.s32 %v463, 64
        %v560 = vsub.s32 %v464, 64
        %v561 = vsub.s32 %v465, 64
        %v562 = vsub.s32 %v466, 64
        %v563 = vsub.s32 %v467, 64
        %v564 = vsub.s32 %v468, 64
        %v565 = vsub.s32 %v469, 64
        %v566 = vsub.s32 %v470, 64
        %v567 = vsub.s32 %v471, 64
        %v568 = vsub.s32 %v472, 64
        %v569 = vsub.s32 %v473, 64
        %v570 = vsub.s32 %v474, 64
        %v571 = vsub.s32 %v475, 64
        %v572 = vsub.s32 %v476, 64
        %v573 = vsub.s32 %v477, 64
        %v574 = vadd.s32 %v558, 128
        %v575 = vadd.s32 %v559, 128
        %v576 = vadd.s32 %v560, 128
        %v577 = vadd.s32 %v561, 128
        %v578 = vadd.s32 %v562, 128
        %v579 = vadd.s32 %v563, 128
        %v580 = vadd.s32 %v564, 128
        %v581 = vadd.s32 %v565, 128
        %v582 = vadd.s32 %v566, 128
        %v583 = vadd.s32 %v567, 128
        %v584 = vadd.s32 %v568, 128
        %v585 = vadd.s32 %v569, 128
        %v586 = vadd.s32 %v570, 128
        %v587 = vadd.s32 %v571, 128
        %v588 = vadd.s32 %v572, 128
        %v589 = vadd.s32 %v573, 128
        %v590 = vsel %vm510, %v574, 4294967295
        %v591 = vsel %vm511, %v575, 4294967295
        %v592 = vsel %vm512, %v576, 4294967295
        %v593 = vsel %vm513, %v577, 4294967295
        %v594 = vsel %vm514, %v578, 4294967295
        %v595 = vsel %vm515, %v579, 4294967295
        %v596 = vsel %vm516, %v580, 4294967295
        %v597 = vsel %vm517, %v581, 4294967295
        %v598 = vsel %vm518, %v582, 4294967295
        %v599 = vsel %vm519, %v583, 4294967295
        %v600 = vsel %vm520, %v584, 4294967295
        %v601 = vsel %vm521, %v585, 4294967295
        %v602 = vsel %vm522, %v586, 4294967295
        %v603 = vsel %vm523, %v587, 4294967295
        %v604 = vsel %vm524, %v588, 4294967295
        %v605 = vsel %vm525, %v589, 4294967295
        %vm606 = vcmp.ge.s32.totalorder %v462, 112
        %vm607 = vcmp.ge.s32.totalorder %v463, 112
        %vm608 = vcmp.ge.s32.totalorder %v464, 112
        %vm609 = vcmp.ge.s32.totalorder %v465, 112
        %vm610 = vcmp.ge.s32.totalorder %v466, 112
        %vm611 = vcmp.ge.s32.totalorder %v467, 112
        %vm612 = vcmp.ge.s32.totalorder %v468, 112
        %vm613 = vcmp.ge.s32.totalorder %v469, 112
        %vm614 = vcmp.ge.s32.totalorder %v470, 112
        %vm615 = vcmp.ge.s32.totalorder %v471, 112
        %vm616 = vcmp.ge.s32.totalorder %v472, 112
        %vm617 = vcmp.ge.s32.totalorder %v473, 112
        %vm618 = vcmp.ge.s32.totalorder %v474, 112
        %vm619 = vcmp.ge.s32.totalorder %v475, 112
        %vm620 = vcmp.ge.s32.totalorder %v476, 112
        %vm621 = vcmp.ge.s32.totalorder %v477, 112
        %vm622 = vcmp.lt.s32.totalorder %v462, 160
        %vm623 = vcmp.lt.s32.totalorder %v463, 160
        %vm624 = vcmp.lt.s32.totalorder %v464, 160
        %vm625 = vcmp.lt.s32.totalorder %v465, 160
        %vm626 = vcmp.lt.s32.totalorder %v466, 160
        %vm627 = vcmp.lt.s32.totalorder %v467, 160
        %vm628 = vcmp.lt.s32.totalorder %v468, 160
        %vm629 = vcmp.lt.s32.totalorder %v469, 160
        %vm630 = vcmp.lt.s32.totalorder %v470, 160
        %vm631 = vcmp.lt.s32.totalorder %v471, 160
        %vm632 = vcmp.lt.s32.totalorder %v472, 160
        %vm633 = vcmp.lt.s32.totalorder %v473, 160
        %vm634 = vcmp.lt.s32.totalorder %v474, 160
        %vm635 = vcmp.lt.s32.totalorder %v475, 160
        %vm636 = vcmp.lt.s32.totalorder %v476, 160
        %vm637 = vcmp.lt.s32.totalorder %v477, 160
        %vm638 = vmand %vm606, %vm622
        %vm639 = vmand %vm607, %vm623
        %vm640 = vmand %vm608, %vm624
        %vm641 = vmand %vm609, %vm625
        %vm642 = vmand %vm610, %vm626
        %vm643 = vmand %vm611, %vm627
        %vm644 = vmand %vm612, %vm628
        %vm645 = vmand %vm613, %vm629
        %vm646 = vmand %vm614, %vm630
        %vm647 = vmand %vm615, %vm631
        %vm648 = vmand %vm616, %vm632
        %vm649 = vmand %vm617, %vm633
        %vm650 = vmand %vm618, %vm634
        %vm651 = vmand %vm619, %vm635
        %vm652 = vmand %vm620, %vm636
        %vm653 = vmand %vm621, %vm637
        %v654 = vsel %vm638, 2, %v526
        %v655 = vsel %vm639, 2, %v527
        %v656 = vsel %vm640, 2, %v528
        %v657 = vsel %vm641, 2, %v529
        %v658 = vsel %vm642, 2, %v530
        %v659 = vsel %vm643, 2, %v531
        %v660 = vsel %vm644, 2, %v532
        %v661 = vsel %vm645, 2, %v533
        %v662 = vsel %vm646, 2, %v534
        %v663 = vsel %vm647, 2, %v535
        %v664 = vsel %vm648, 2, %v536
        %v665 = vsel %vm649, 2, %v537
        %v666 = vsel %vm650, 2, %v538
        %v667 = vsel %vm651, 2, %v539
        %v668 = vsel %vm652, 2, %v540
        %v669 = vsel %vm653, 2, %v541
        %v670 = vsel %vm638, 65, %v542
        %v671 = vsel %vm639, 65, %v543
        %v672 = vsel %vm640, 65, %v544
        %v673 = vsel %vm641, 65, %v545
        %v674 = vsel %vm642, 65, %v546
        %v675 = vsel %vm643, 65, %v547
        %v676 = vsel %vm644, 65, %v548
        %v677 = vsel %vm645, 65, %v549
        %v678 = vsel %vm646, 65, %v550
        %v679 = vsel %vm647, 65, %v551
        %v680 = vsel %vm648, 65, %v552
        %v681 = vsel %vm649, 65, %v553
        %v682 = vsel %vm650, 65, %v554
        %v683 = vsel %vm651, 65, %v555
        %v684 = vsel %vm652, 65, %v556
        %v685 = vsel %vm653, 65, %v557
        %v686 = vsub.s32 %v462, 112
        %v687 = vsub.s32 %v463, 112
        %v688 = vsub.s32 %v464, 112
        %v689 = vsub.s32 %v465, 112
        %v690 = vsub.s32 %v466, 112
        %v691 = vsub.s32 %v467, 112
        %v692 = vsub.s32 %v468, 112
        %v693 = vsub.s32 %v469, 112
        %v694 = vsub.s32 %v470, 112
        %v695 = vsub.s32 %v471, 112
        %v696 = vsub.s32 %v472, 112
        %v697 = vsub.s32 %v473, 112
        %v698 = vsub.s32 %v474, 112
        %v699 = vsub.s32 %v475, 112
        %v700 = vsub.s32 %v476, 112
        %v701 = vsub.s32 %v477, 112
        %v702 = vadd.s32 %v686, 256
        %v703 = vadd.s32 %v687, 256
        %v704 = vadd.s32 %v688, 256
        %v705 = vadd.s32 %v689, 256
        %v706 = vadd.s32 %v690, 256
        %v707 = vadd.s32 %v691, 256
        %v708 = vadd.s32 %v692, 256
        %v709 = vadd.s32 %v693, 256
        %v710 = vadd.s32 %v694, 256
        %v711 = vadd.s32 %v695, 256
        %v712 = vadd.s32 %v696, 256
        %v713 = vadd.s32 %v697, 256
        %v714 = vadd.s32 %v698, 256
        %v715 = vadd.s32 %v699, 256
        %v716 = vadd.s32 %v700, 256
        %v717 = vadd.s32 %v701, 256
        %v718 = vsel %vm638, %v702, %v590
        %v719 = vsel %vm639, %v703, %v591
        %v720 = vsel %vm640, %v704, %v592
        %v721 = vsel %vm641, %v705, %v593
        %v722 = vsel %vm642, %v706, %v594
        %v723 = vsel %vm643, %v707, %v595
        %v724 = vsel %vm644, %v708, %v596
        %v725 = vsel %vm645, %v709, %v597
        %v726 = vsel %vm646, %v710, %v598
        %v727 = vsel %vm647, %v711, %v599
        %v728 = vsel %vm648, %v712, %v600
        %v729 = vsel %vm649, %v713, %v601
        %v730 = vsel %vm650, %v714, %v602
        %v731 = vsel %vm651, %v715, %v603
        %v732 = vsel %vm652, %v716, %v604
        %v733 = vsel %vm653, %v717, %v605
        %v734 = vlaneseq
        %v735 = vand.u32 %v734, 127
        %v736 = vstv %s460
        %vm737 = vcmp.eq.s32.totalorder %v735, %v736
        %v738 = vld [vmem:[#allocation2] sm:$0xff]
        %v739 = vld [vmem:[#allocation2 + $0x8] sm:$0xff]
        %v740 = vld [vmem:[#allocation2 + $0x10] sm:$0xff]
        %v741 = vld [vmem:[#allocation2 + $0x18] sm:$0xff]
        %v742 = vld [vmem:[#allocation2 + $0x20] sm:$0xff]
        %v743 = vld [vmem:[#allocation2 + $0x28] sm:$0xff]
        %v744 = vld [vmem:[#allocation2 + $0x30] sm:$0xff]
        %v745 = vld [vmem:[#allocation2 + $0x38] sm:$0xff]
        %v746 = vld [vmem:[#allocation2 + $0x40] sm:$0xff]
        %v747 = vld [vmem:[#allocation2 + $0x48] sm:$0xff]
        %v748 = vld [vmem:[#allocation2 + $0x50] sm:$0xff]
        %v749 = vld [vmem:[#allocation2 + $0x58] sm:$0xff]
        %v750 = vld [vmem:[#allocation2 + $0x60] sm:$0xff]
        %v751 = vld [vmem:[#allocation2 + $0x68] sm:$0xff]
        %v752 = vld [vmem:[#allocation2 + $0x70] sm:$0xff]
        %v753 = vld [vmem:[#allocation2 + $0x78] sm:$0xff]
        %v754 = vsel %vm737, %v738, 0.0
        %v755 = vsel %vm737, %v739, 0.0
        %v756 = vsel %vm737, %v740, 0.0
        %v757 = vsel %vm737, %v741, 0.0
        %v758 = vsel %vm737, %v742, 0.0
        %v759 = vsel %vm737, %v743, 0.0
        %v760 = vsel %vm737, %v744, 0.0
        %v761 = vsel %vm737, %v745, 0.0
        %v762 = vsel %vm737, %v746, 0.0
        %v763 = vsel %vm737, %v747, 0.0
        %v764 = vsel %vm737, %v748, 0.0
        %v765 = vsel %vm737, %v749, 0.0
        %v766 = vsel %vm737, %v750, 0.0
        %v767 = vsel %vm737, %v751, 0.0
        %v768 = vsel %vm737, %v752, 0.0
        %v769 = vsel %vm737, %v753, 0.0
        %vm770 = vcmask 64512
        %v771 = vsel %vm770, %v754, 0.0
        %772 = vadd.xlane.f32.xlu0 %v771
        %v773 = vpop.xlane.xlu0 %772
        %v774 = vsel %vm770, %v755, 0.0
        %775 = vadd.xlane.f32.xlu0 %v774
        %v776 = vpop.xlane.xlu0 %775
        %v777 = vsel %vm770, %v756, 0.0
        %778 = vadd.xlane.f32.xlu0 %v777
        %v779 = vpop.xlane.xlu0 %778
        %v780 = vsel %vm770, %v757, 0.0
        %781 = vadd.xlane.f32.xlu0 %v780
        %v782 = vpop.xlane.xlu0 %781
        %v783 = vsel %vm770, %v758, 0.0
        %784 = vadd.xlane.f32.xlu0 %v783
        %v785 = vpop.xlane.xlu0 %784
        %v786 = vsel %vm770, %v759, 0.0
        %787 = vadd.xlane.f32.xlu0 %v786
        %v788 = vpop.xlane.xlu0 %787
        %v789 = vsel %vm770, %v760, 0.0
        %790 = vadd.xlane.f32.xlu0 %v789
        %v791 = vpop.xlane.xlu0 %790
        %v792 = vsel %vm770, %v761, 0.0
        %793 = vadd.xlane.f32.xlu0 %v792
        %v794 = vpop.xlane.xlu0 %793
        %v795 = vsel %vm770, %v762, 0.0
        %796 = vadd.xlane.f32.xlu0 %v795
        %v797 = vpop.xlane.xlu0 %796
        %v798 = vsel %vm770, %v763, 0.0
        %799 = vadd.xlane.f32.xlu0 %v798
        %v800 = vpop.xlane.xlu0 %799
        %v801 = vsel %vm770, %v764, 0.0
        %802 = vadd.xlane.f32.xlu0 %v801
        %v803 = vpop.xlane.xlu0 %802
        %v804 = vsel %vm770, %v765, 0.0
        %805 = vadd.xlane.f32.xlu0 %v804
        %v806 = vpop.xlane.xlu0 %805
        %v807 = vsel %vm770, %v766, 0.0
        %808 = vadd.xlane.f32.xlu0 %v807
        %v809 = vpop.xlane.xlu0 %808
        %v810 = vsel %vm770, %v767, 0.0
        %811 = vadd.xlane.f32.xlu0 %v810
        %v812 = vpop.xlane.xlu0 %811
        %v813 = vsel %vm770, %v768, 0.0
        %814 = vadd.xlane.f32.xlu0 %v813
        %v815 = vpop.xlane.xlu0 %814
        %v816 = vsel %vm770, %v769, 0.0
        %817 = vadd.xlane.f32.xlu0 %v816
        %v818 = vpop.xlane.xlu0 %817
        %v819 = vld [vmem:[#allocation3] sm:$0xff]
        %v820 = vld [vmem:[#allocation3 + $0x8] sm:$0xff]
        %v821 = vld [vmem:[#allocation3 + $0x10] sm:$0xff]
        %v822 = vld [vmem:[#allocation3 + $0x18] sm:$0xff]
        %v823 = vld [vmem:[#allocation3 + $0x20] sm:$0xff]
        %v824 = vld [vmem:[#allocation3 + $0x28] sm:$0xff]
        %v825 = vld [vmem:[#allocation3 + $0x30] sm:$0xff]
        %v826 = vld [vmem:[#allocation3 + $0x38] sm:$0xff]
        %v827 = vld [vmem:[#allocation3 + $0x40] sm:$0xff]
        %v828 = vld [vmem:[#allocation3 + $0x48] sm:$0xff]
        %v829 = vld [vmem:[#allocation3 + $0x50] sm:$0xff]
        %v830 = vld [vmem:[#allocation3 + $0x58] sm:$0xff]
        %v831 = vld [vmem:[#allocation3 + $0x60] sm:$0xff]
        %v832 = vld [vmem:[#allocation3 + $0x68] sm:$0xff]
        %v833 = vld [vmem:[#allocation3 + $0x70] sm:$0xff]
        %v834 = vld [vmem:[#allocation3 + $0x78] sm:$0xff]
        %v835 = vsel %vm737, %v819, 0.0
        %v836 = vsel %vm737, %v820, 0.0
        %v837 = vsel %vm737, %v821, 0.0
        %v838 = vsel %vm737, %v822, 0.0
        %v839 = vsel %vm737, %v823, 0.0
        %v840 = vsel %vm737, %v824, 0.0
        %v841 = vsel %vm737, %v825, 0.0
        %v842 = vsel %vm737, %v826, 0.0
        %v843 = vsel %vm737, %v827, 0.0
        %v844 = vsel %vm737, %v828, 0.0
        %v845 = vsel %vm737, %v829, 0.0
        %v846 = vsel %vm737, %v830, 0.0
        %v847 = vsel %vm737, %v831, 0.0
        %v848 = vsel %vm737, %v832, 0.0
        %v849 = vsel %vm737, %v833, 0.0
        %v850 = vsel %vm737, %v834, 0.0
        %v851 = vsel %vm770, %v835, 0.0
        %852 = vadd.xlane.f32.xlu0 %v851
        %v853 = vpop.xlane.xlu0 %852
        %v854 = vsel %vm770, %v836, 0.0
        %855 = vadd.xlane.f32.xlu0 %v854
        %v856 = vpop.xlane.xlu0 %855
        %v857 = vsel %vm770, %v837, 0.0
        %858 = vadd.xlane.f32.xlu0 %v857
        %v859 = vpop.xlane.xlu0 %858
        %v860 = vsel %vm770, %v838, 0.0
        %861 = vadd.xlane.f32.xlu0 %v860
        %v862 = vpop.xlane.xlu0 %861
        %v863 = vsel %vm770, %v839, 0.0
        %864 = vadd.xlane.f32.xlu0 %v863
        %v865 = vpop.xlane.xlu0 %864
        %v866 = vsel %vm770, %v840, 0.0
        %867 = vadd.xlane.f32.xlu0 %v866
        %v868 = vpop.xlane.xlu0 %867
        %v869 = vsel %vm770, %v841, 0.0
        %870 = vadd.xlane.f32.xlu0 %v869
        %v871 = vpop.xlane.xlu0 %870
        %v872 = vsel %vm770, %v842, 0.0
        %873 = vadd.xlane.f32.xlu0 %v872
        %v874 = vpop.xlane.xlu0 %873
        %v875 = vsel %vm770, %v843, 0.0
        %876 = vadd.xlane.f32.xlu0 %v875
        %v877 = vpop.xlane.xlu0 %876
        %v878 = vsel %vm770, %v844, 0.0
        %879 = vadd.xlane.f32.xlu0 %v878
        %v880 = vpop.xlane.xlu0 %879
        %v881 = vsel %vm770, %v845, 0.0
        %882 = vadd.xlane.f32.xlu0 %v881
        %v883 = vpop.xlane.xlu0 %882
        %v884 = vsel %vm770, %v846, 0.0
        %885 = vadd.xlane.f32.xlu0 %v884
        %v886 = vpop.xlane.xlu0 %885
        %v887 = vsel %vm770, %v847, 0.0
        %888 = vadd.xlane.f32.xlu0 %v887
        %v889 = vpop.xlane.xlu0 %888
        %v890 = vsel %vm770, %v848, 0.0
        %891 = vadd.xlane.f32.xlu0 %v890
        %v892 = vpop.xlane.xlu0 %891
        %v893 = vsel %vm770, %v849, 0.0
        %894 = vadd.xlane.f32.xlu0 %v893
        %v895 = vpop.xlane.xlu0 %894
        %v896 = vsel %vm770, %v850, 0.0
        %897 = vadd.xlane.f32.xlu0 %v896
        %v898 = vpop.xlane.xlu0 %897
        %899 = vmax.xlane.f32.xlu0 %v410
        %v900 = vpop.xlane.xlu0 %899
        %901 = vmax.xlane.f32.xlu0 %v413
        %v902 = vpop.xlane.xlu0 %901
        %903 = vmax.xlane.f32.xlu0 %v416
        %v904 = vpop.xlane.xlu0 %903
        %905 = vmax.xlane.f32.xlu0 %v419
        %v906 = vpop.xlane.xlu0 %905
        %907 = vmax.xlane.f32.xlu0 %v422
        %v908 = vpop.xlane.xlu0 %907
        %909 = vmax.xlane.f32.xlu0 %v425
        %v910 = vpop.xlane.xlu0 %909
        %911 = vmax.xlane.f32.xlu0 %v428
        %v912 = vpop.xlane.xlu0 %911
        %913 = vmax.xlane.f32.xlu0 %v431
        %v914 = vpop.xlane.xlu0 %913
        %915 = vmax.xlane.f32.xlu0 %v434
        %v916 = vpop.xlane.xlu0 %915
        %917 = vmax.xlane.f32.xlu0 %v437
        %v918 = vpop.xlane.xlu0 %917
        %919 = vmax.xlane.f32.xlu0 %v440
        %v920 = vpop.xlane.xlu0 %919
        %921 = vmax.xlane.f32.xlu0 %v443
        %v922 = vpop.xlane.xlu0 %921
        %923 = vmax.xlane.f32.xlu0 %v446
        %v924 = vpop.xlane.xlu0 %923
        %925 = vmax.xlane.f32.xlu0 %v449
        %v926 = vpop.xlane.xlu0 %925
        %927 = vmax.xlane.f32.xlu0 %v452
        %v928 = vpop.xlane.xlu0 %927
        %929 = vmax.xlane.f32.xlu0 %v455
        %v930 = vpop.xlane.xlu0 %929
        %v931 = vmax.f32 %v773, %v900
        %v932 = vmax.f32 %v776, %v902
        %v933 = vmax.f32 %v779, %v904
        %v934 = vmax.f32 %v782, %v906
        %v935 = vmax.f32 %v785, %v908
        %v936 = vmax.f32 %v788, %v910
        %v937 = vmax.f32 %v791, %v912
        %v938 = vmax.f32 %v794, %v914
        %v939 = vmax.f32 %v797, %v916
        %v940 = vmax.f32 %v800, %v918
        %v941 = vmax.f32 %v803, %v920
        %v942 = vmax.f32 %v806, %v922
        %v943 = vmax.f32 %v809, %v924
        %v944 = vmax.f32 %v812, %v926
        %v945 = vmax.f32 %v815, %v928
        %v946 = vmax.f32 %v818, %v930
        %v947 = vsub.f32 %v410, %v931
        %v948 = vsub.f32 %v413, %v932
        %v949 = vsub.f32 %v416, %v933
        %v950 = vsub.f32 %v419, %v934
        %v951 = vsub.f32 %v422, %v935
        %v952 = vsub.f32 %v425, %v936
        %v953 = vsub.f32 %v428, %v937
        %v954 = vsub.f32 %v431, %v938
        %v955 = vsub.f32 %v434, %v939
        %v956 = vsub.f32 %v437, %v940
        %v957 = vsub.f32 %v440, %v941
        %v958 = vsub.f32 %v443, %v942
        %v959 = vsub.f32 %v446, %v943
        %v960 = vsub.f32 %v449, %v944
        %v961 = vsub.f32 %v452, %v945
        %v962 = vsub.f32 %v455, %v946
        %v963 = vmul.f32 %v947, 1.442695
        %v964 = vpow.pop %v963
        %v965 = vmul.f32 %v948, 1.442695
        %v966 = vpow.pop %v965
        %v967 = vmul.f32 %v949, 1.442695
        %v968 = vpow.pop %v967
        %v969 = vmul.f32 %v950, 1.442695
        %v970 = vpow.pop %v969
        %v971 = vmul.f32 %v951, 1.442695
        %v972 = vpow.pop %v971
        %v973 = vmul.f32 %v952, 1.442695
        %v974 = vpow.pop %v973
        %v975 = vmul.f32 %v953, 1.442695
        %v976 = vpow.pop %v975
        %v977 = vmul.f32 %v954, 1.442695
        %v978 = vpow.pop %v977
        %v979 = vmul.f32 %v955, 1.442695
        %v980 = vpow.pop %v979
        %v981 = vmul.f32 %v956, 1.442695
        %v982 = vpow.pop %v981
        %v983 = vmul.f32 %v957, 1.442695
        %v984 = vpow.pop %v983
        %v985 = vmul.f32 %v958, 1.442695
        %v986 = vpow.pop %v985
        %v987 = vmul.f32 %v959, 1.442695
        %v988 = vpow.pop %v987
        %v989 = vmul.f32 %v960, 1.442695
        %v990 = vpow.pop %v989
        %v991 = vmul.f32 %v961, 1.442695
        %v992 = vpow.pop %v991
        %v993 = vmul.f32 %v962, 1.442695
        %v994 = vpow.pop %v993
        %995 = vadd.xlane.f32.xlu0 %v964
        %v996 = vpop.xlane.xlu0 %995
        %997 = vadd.xlane.f32.xlu0 %v966
        %v998 = vpop.xlane.xlu0 %997
        %999 = vadd.xlane.f32.xlu0 %v968
        %v1000 = vpop.xlane.xlu0 %999
        %1001 = vadd.xlane.f32.xlu0 %v970
        %v1002 = vpop.xlane.xlu0 %1001
        %1003 = vadd.xlane.f32.xlu0 %v972
        %v1004 = vpop.xlane.xlu0 %1003
        %1005 = vadd.xlane.f32.xlu0 %v974
        %v1006 = vpop.xlane.xlu0 %1005
        %1007 = vadd.xlane.f32.xlu0 %v976
        %v1008 = vpop.xlane.xlu0 %1007
        %1009 = vadd.xlane.f32.xlu0 %v978
        %v1010 = vpop.xlane.xlu0 %1009
        %1011 = vadd.xlane.f32.xlu0 %v980
        %v1012 = vpop.xlane.xlu0 %1011
        %1013 = vadd.xlane.f32.xlu0 %v982
        %v1014 = vpop.xlane.xlu0 %1013
        %1015 = vadd.xlane.f32.xlu0 %v984
        %v1016 = vpop.xlane.xlu0 %1015
        %1017 = vadd.xlane.f32.xlu0 %v986
        %v1018 = vpop.xlane.xlu0 %1017
        %1019 = vadd.xlane.f32.xlu0 %v988
        %v1020 = vpop.xlane.xlu0 %1019
        %1021 = vadd.xlane.f32.xlu0 %v990
        %v1022 = vpop.xlane.xlu0 %1021
        %1023 = vadd.xlane.f32.xlu0 %v992
        %v1024 = vpop.xlane.xlu0 %1023
        %1025 = vadd.xlane.f32.xlu0 %v994
        %v1026 = vpop.xlane.xlu0 %1025
        %v1027 = vsub.f32 %v773, %v931
        %v1028 = vsub.f32 %v776, %v932
        %v1029 = vsub.f32 %v779, %v933
        %v1030 = vsub.f32 %v782, %v934
        %v1031 = vsub.f32 %v785, %v935
        %v1032 = vsub.f32 %v788, %v936
        %v1033 = vsub.f32 %v791, %v937
        %v1034 = vsub.f32 %v794, %v938
        %v1035 = vsub.f32 %v797, %v939
        %v1036 = vsub.f32 %v800, %v940
        %v1037 = vsub.f32 %v803, %v941
        %v1038 = vsub.f32 %v806, %v942
        %v1039 = vsub.f32 %v809, %v943
        %v1040 = vsub.f32 %v812, %v944
        %v1041 = vsub.f32 %v815, %v945
        %v1042 = vsub.f32 %v818, %v946
        %v1043 = vmul.f32 %v1027, 1.442695
        %v1044 = vpow.pop %v1043
        %v1045 = vmul.f32 %v1028, 1.442695
        %v1046 = vpow.pop %v1045
        %v1047 = vmul.f32 %v1029, 1.442695
        %v1048 = vpow.pop %v1047
        %v1049 = vmul.f32 %v1030, 1.442695
        %v1050 = vpow.pop %v1049
        %v1051 = vmul.f32 %v1031, 1.442695
        %v1052 = vpow.pop %v1051
        %v1053 = vmul.f32 %v1032, 1.442695
        %v1054 = vpow.pop %v1053
        %v1055 = vmul.f32 %v1033, 1.442695
        %v1056 = vpow.pop %v1055
        %v1057 = vmul.f32 %v1034, 1.442695
        %v1058 = vpow.pop %v1057
        %v1059 = vmul.f32 %v1035, 1.442695
        %v1060 = vpow.pop %v1059
        %v1061 = vmul.f32 %v1036, 1.442695
        %v1062 = vpow.pop %v1061
        %v1063 = vmul.f32 %v1037, 1.442695
        %v1064 = vpow.pop %v1063
        %v1065 = vmul.f32 %v1038, 1.442695
        %v1066 = vpow.pop %v1065
        %v1067 = vmul.f32 %v1039, 1.442695
        %v1068 = vpow.pop %v1067
        %v1069 = vmul.f32 %v1040, 1.442695
        %v1070 = vpow.pop %v1069
        %v1071 = vmul.f32 %v1041, 1.442695
        %v1072 = vpow.pop %v1071
        %v1073 = vmul.f32 %v1042, 1.442695
        %v1074 = vpow.pop %v1073
        %v1075 = vmul.f32 %v853, %v1044
        %v1076 = vmul.f32 %v856, %v1046
        %v1077 = vmul.f32 %v859, %v1048
        %v1078 = vmul.f32 %v862, %v1050
        %v1079 = vmul.f32 %v865, %v1052
        %v1080 = vmul.f32 %v868, %v1054
        %v1081 = vmul.f32 %v871, %v1056
        %v1082 = vmul.f32 %v874, %v1058
        %v1083 = vmul.f32 %v877, %v1060
        %v1084 = vmul.f32 %v880, %v1062
        %v1085 = vmul.f32 %v883, %v1064
        %v1086 = vmul.f32 %v886, %v1066
        %v1087 = vmul.f32 %v889, %v1068
        %v1088 = vmul.f32 %v892, %v1070
        %v1089 = vmul.f32 %v895, %v1072
        %v1090 = vmul.f32 %v898, %v1074
        %v1091 = vadd.f32 %v1075, %v996
        %v1092 = vadd.f32 %v1076, %v998
        %v1093 = vadd.f32 %v1077, %v1000
        %v1094 = vadd.f32 %v1078, %v1002
        %v1095 = vadd.f32 %v1079, %v1004
        %v1096 = vadd.f32 %v1080, %v1006
        %v1097 = vadd.f32 %v1081, %v1008
        %v1098 = vadd.f32 %v1082, %v1010
        %v1099 = vadd.f32 %v1083, %v1012
        %v1100 = vadd.f32 %v1084, %v1014
        %v1101 = vadd.f32 %v1085, %v1016
        %v1102 = vadd.f32 %v1086, %v1018
        %v1103 = vadd.f32 %v1087, %v1020
        %v1104 = vadd.f32 %v1088, %v1022
        %v1105 = vadd.f32 %v1089, %v1024
        %v1106 = vadd.f32 %v1090, %v1026
        %v1107 = vsel %vm737, %v931, %v738
        %v1108 = vsel %vm737, %v932, %v739
        %v1109 = vsel %vm737, %v933, %v740
        %v1110 = vsel %vm737, %v934, %v741
        %v1111 = vsel %vm737, %v935, %v742
        %v1112 = vsel %vm737, %v936, %v743
        %v1113 = vsel %vm737, %v937, %v744
        %v1114 = vsel %vm737, %v938, %v745
        %v1115 = vsel %vm737, %v939, %v746
        %v1116 = vsel %vm737, %v940, %v747
        %v1117 = vsel %vm737, %v941, %v748
        %v1118 = vsel %vm737, %v942, %v749
        %v1119 = vsel %vm737, %v943, %v750
        %v1120 = vsel %vm737, %v944, %v751
        %v1121 = vsel %vm737, %v945, %v752
        %v1122 = vsel %vm737, %v946, %v753
        %1123 = vst.msk [vmem:[#allocation2] sm:$0xff] %vm770, %v1107
        %1124 = vst.msk [vmem:[#allocation2 + $0x8] sm:$0xff] %vm770, %v1108
        %1125 = vst.msk [vmem:[#allocation2 + $0x10] sm:$0xff] %vm770, %v1109
        %1126 = vst.msk [vmem:[#allocation2 + $0x18] sm:$0xff] %vm770, %v1110
        %1127 = vst.msk [vmem:[#allocation2 + $0x20] sm:$0xff] %vm770, %v1111
        %1128 = vst.msk [vmem:[#allocation2 + $0x28] sm:$0xff] %vm770, %v1112
        %1129 = vst.msk [vmem:[#allocation2 + $0x30] sm:$0xff] %vm770, %v1113
        %1130 = vst.msk [vmem:[#allocation2 + $0x38] sm:$0xff] %vm770, %v1114
        %1131 = vst.msk [vmem:[#allocation2 + $0x40] sm:$0xff] %vm770, %v1115
        %1132 = vst.msk [vmem:[#allocation2 + $0x48] sm:$0xff] %vm770, %v1116
        %1133 = vst.msk [vmem:[#allocation2 + $0x50] sm:$0xff] %vm770, %v1117
        %1134 = vst.msk [vmem:[#allocation2 + $0x58] sm:$0xff] %vm770, %v1118
        %1135 = vst.msk [vmem:[#allocation2 + $0x60] sm:$0xff] %vm770, %v1119
        %1136 = vst.msk [vmem:[#allocation2 + $0x68] sm:$0xff] %vm770, %v1120
        %1137 = vst.msk [vmem:[#allocation2 + $0x70] sm:$0xff] %vm770, %v1121
        %1138 = vst.msk [vmem:[#allocation2 + $0x78] sm:$0xff] %vm770, %v1122
        %v1139 = vld [vmem:[#allocation3] sm:$0xff]
        %v1140 = vld [vmem:[#allocation3 + $0x8] sm:$0xff]
        %v1141 = vld [vmem:[#allocation3 + $0x10] sm:$0xff]
        %v1142 = vld [vmem:[#allocation3 + $0x18] sm:$0xff]
        %v1143 = vld [vmem:[#allocation3 + $0x20] sm:$0xff]
        %v1144 = vld [vmem:[#allocation3 + $0x28] sm:$0xff]
        %v1145 = vld [vmem:[#allocation3 + $0x30] sm:$0xff]
        %v1146 = vld [vmem:[#allocation3 + $0x38] sm:$0xff]
        %v1147 = vld [vmem:[#allocation3 + $0x40] sm:$0xff]
        %v1148 = vld [vmem:[#allocation3 + $0x48] sm:$0xff]
        %v1149 = vld [vmem:[#allocation3 + $0x50] sm:$0xff]
        %v1150 = vld [vmem:[#allocation3 + $0x58] sm:$0xff]
        %v1151 = vld [vmem:[#allocation3 + $0x60] sm:$0xff]
        %v1152 = vld [vmem:[#allocation3 + $0x68] sm:$0xff]
        %v1153 = vld [vmem:[#allocation3 + $0x70] sm:$0xff]
        %v1154 = vld [vmem:[#allocation3 + $0x78] sm:$0xff]
        %v1155 = vsel %vm737, %v1091, %v1139
        %v1156 = vsel %vm737, %v1092, %v1140
        %v1157 = vsel %vm737, %v1093, %v1141
        %v1158 = vsel %vm737, %v1094, %v1142
        %v1159 = vsel %vm737, %v1095, %v1143
        %v1160 = vsel %vm737, %v1096, %v1144
        %v1161 = vsel %vm737, %v1097, %v1145
        %v1162 = vsel %vm737, %v1098, %v1146
        %v1163 = vsel %vm737, %v1099, %v1147
        %v1164 = vsel %vm737, %v1100, %v1148
        %v1165 = vsel %vm737, %v1101, %v1149
        %v1166 = vsel %vm737, %v1102, %v1150
        %v1167 = vsel %vm737, %v1103, %v1151
        %v1168 = vsel %vm737, %v1104, %v1152
        %v1169 = vsel %vm737, %v1105, %v1153
        %v1170 = vsel %vm737, %v1106, %v1154
        %1171 = vst.msk [vmem:[#allocation3] sm:$0xff] %vm770, %v1155
        %1172 = vst.msk [vmem:[#allocation3 + $0x8] sm:$0xff] %vm770, %v1156
        %1173 = vst.msk [vmem:[#allocation3 + $0x10] sm:$0xff] %vm770, %v1157
        %1174 = vst.msk [vmem:[#allocation3 + $0x18] sm:$0xff] %vm770, %v1158
        %1175 = vst.msk [vmem:[#allocation3 + $0x20] sm:$0xff] %vm770, %v1159
        %1176 = vst.msk [vmem:[#allocation3 + $0x28] sm:$0xff] %vm770, %v1160
        %1177 = vst.msk [vmem:[#allocation3 + $0x30] sm:$0xff] %vm770, %v1161
        %1178 = vst.msk [vmem:[#allocation3 + $0x38] sm:$0xff] %vm770, %v1162
        %1179 = vst.msk [vmem:[#allocation3 + $0x40] sm:$0xff] %vm770, %v1163
        %1180 = vst.msk [vmem:[#allocation3 + $0x48] sm:$0xff] %vm770, %v1164
        %1181 = vst.msk [vmem:[#allocation3 + $0x50] sm:$0xff] %vm770, %v1165
        %1182 = vst.msk [vmem:[#allocation3 + $0x58] sm:$0xff] %vm770, %v1166
        %1183 = vst.msk [vmem:[#allocation3 + $0x60] sm:$0xff] %vm770, %v1167
        %1184 = vst.msk [vmem:[#allocation3 + $0x68] sm:$0xff] %vm770, %v1168
        %1185 = vst.msk [vmem:[#allocation3 + $0x70] sm:$0xff] %vm770, %v1169
        %1186 = vst.msk [vmem:[#allocation3 + $0x78] sm:$0xff] %vm770, %v1170
        %vm1187 = vcmp.eq.s32.totalorder %v654, %v736
        %vm1188 = vcmp.eq.s32.totalorder %v655, %v736
        %vm1189 = vcmp.eq.s32.totalorder %v656, %v736
        %vm1190 = vcmp.eq.s32.totalorder %v657, %v736
        %vm1191 = vcmp.eq.s32.totalorder %v658, %v736
        %vm1192 = vcmp.eq.s32.totalorder %v659, %v736
        %vm1193 = vcmp.eq.s32.totalorder %v660, %v736
        %vm1194 = vcmp.eq.s32.totalorder %v661, %v736
        %vm1195 = vcmp.eq.s32.totalorder %v662, %v736
        %vm1196 = vcmp.eq.s32.totalorder %v663, %v736
        %vm1197 = vcmp.eq.s32.totalorder %v664, %v736
        %vm1198 = vcmp.eq.s32.totalorder %v665, %v736
        %vm1199 = vcmp.eq.s32.totalorder %v666, %v736
        %vm1200 = vcmp.eq.s32.totalorder %v667, %v736
        %vm1201 = vcmp.eq.s32.totalorder %v668, %v736
        %vm1202 = vcmp.eq.s32.totalorder %v669, %v736
        %v1203 = vsel %vm1187, %v718, 4294967295
        %v1204 = vsel %vm1188, %v719, 4294967295
        %v1205 = vsel %vm1189, %v720, 4294967295
        %v1206 = vsel %vm1190, %v721, 4294967295
        %v1207 = vsel %vm1191, %v722, 4294967295
        %v1208 = vsel %vm1192, %v723, 4294967295
        %v1209 = vsel %vm1193, %v724, 4294967295
        %v1210 = vsel %vm1194, %v725, 4294967295
        %v1211 = vsel %vm1195, %v726, 4294967295
        %v1212 = vsel %vm1196, %v727, 4294967295
        %v1213 = vsel %vm1197, %v728, 4294967295
        %v1214 = vsel %vm1198, %v729, 4294967295
        %v1215 = vsel %vm1199, %v730, 4294967295
        %v1216 = vsel %vm1200, %v731, 4294967295
        %v1217 = vsel %vm1201, %v732, 4294967295
        %v1218 = vsel %vm1202, %v733, 4294967295
        %s1219 = scalar_select %p461, 1, 0
        %v1220 = vstv %s1219
        %vm1221 = vcmp.eq.s32.totalorder %v1220, 1
        %v1222 = vsel %vm1221, %v670, %v1203
        %v1223 = vsel %vm1221, %v671, %v1204
        %v1224 = vsel %vm1221, %v672, %v1205
        %v1225 = vsel %vm1221, %v673, %v1206
        %v1226 = vsel %vm1221, %v674, %v1207
        %v1227 = vsel %vm1221, %v675, %v1208
        %v1228 = vsel %vm1221, %v676, %v1209
        %v1229 = vsel %vm1221, %v677, %v1210
        %v1230 = vsel %vm1221, %v678, %v1211
        %v1231 = vsel %vm1221, %v679, %v1212
        %v1232 = vsel %vm1221, %v680, %v1213
        %v1233 = vsel %vm1221, %v681, %v1214
        %v1234 = vsel %vm1221, %v682, %v1215
        %v1235 = vsel %vm1221, %v683, %v1216
        %v1236 = vsel %vm1221, %v684, %v1217
        %v1237 = vsel %vm1221, %v685, %v1218
        %s1238 = smul.u32 %s26, 128
        %v1239 = vstv %s1238
        %v1240 = vsub.s32 %v1222, %v1239
        %v1241 = vsub.s32 %v1223, %v1239
        %v1242 = vsub.s32 %v1224, %v1239
        %v1243 = vsub.s32 %v1225, %v1239
        %v1244 = vsub.s32 %v1226, %v1239
        %v1245 = vsub.s32 %v1227, %v1239
        %v1246 = vsub.s32 %v1228, %v1239
        %v1247 = vsub.s32 %v1229, %v1239
        %v1248 = vsub.s32 %v1230, %v1239
        %v1249 = vsub.s32 %v1231, %v1239
        %v1250 = vsub.s32 %v1232, %v1239
        %v1251 = vsub.s32 %v1233, %v1239
        %v1252 = vsub.s32 %v1234, %v1239
        %v1253 = vsub.s32 %v1235, %v1239
        %v1254 = vsub.s32 %v1236, %v1239
        %v1255 = vsub.s32 %v1237, %v1239
        %1256 = vset.pattern.permute.xlu0 0
        %1257 = vperm.xlu0 %1256, %v1240
        %v1258 = vpop.permute.xlu0 %1257
        %1259 = vset.pattern.permute.xlu0 0
        %1260 = vperm.xlu0 %1259, %v1241
        %v1261 = vpop.permute.xlu0 %1260
        %1262 = vset.pattern.permute.xlu0 0
        %1263 = vperm.xlu0 %1262, %v1242
        %v1264 = vpop.permute.xlu0 %1263
        %1265 = vset.pattern.permute.xlu0 0
        %1266 = vperm.xlu0 %1265, %v1243
        %v1267 = vpop.permute.xlu0 %1266
        %1268 = vset.pattern.permute.xlu0 0
        %1269 = vperm.xlu0 %1268, %v1244
        %v1270 = vpop.permute.xlu0 %1269
        %1271 = vset.pattern.permute.xlu0 0
        %1272 = vperm.xlu0 %1271, %v1245
        %v1273 = vpop.permute.xlu0 %1272
        %1274 = vset.pattern.permute.xlu0 0
        %1275 = vperm.xlu0 %1274, %v1246
        %v1276 = vpop.permute.xlu0 %1275
        %1277 = vset.pattern.permute.xlu0 0
        %1278 = vperm.xlu0 %1277, %v1247
        %v1279 = vpop.permute.xlu0 %1278
        %1280 = vset.pattern.permute.xlu0 0
        %1281 = vperm.xlu0 %1280, %v1248
        %v1282 = vpop.permute.xlu0 %1281
        %1283 = vset.pattern.permute.xlu0 0
        %1284 = vperm.xlu0 %1283, %v1249
        %v1285 = vpop.permute.xlu0 %1284
        %1286 = vset.pattern.permute.xlu0 0
        %1287 = vperm.xlu0 %1286, %v1250
        %v1288 = vpop.permute.xlu0 %1287
        %1289 = vset.pattern.permute.xlu0 0
        %1290 = vperm.xlu0 %1289, %v1251
        %v1291 = vpop.permute.xlu0 %1290
        %1292 = vset.pattern.permute.xlu0 0
        %1293 = vperm.xlu0 %1292, %v1252
        %v1294 = vpop.permute.xlu0 %1293
        %1295 = vset.pattern.permute.xlu0 0
        %1296 = vperm.xlu0 %1295, %v1253
        %v1297 = vpop.permute.xlu0 %1296
        %1298 = vset.pattern.permute.xlu0 0
        %1299 = vperm.xlu0 %1298, %v1254
        %v1300 = vpop.permute.xlu0 %1299
        %1301 = vset.pattern.permute.xlu0 0
        %1302 = vperm.xlu0 %1301, %v1255
        %v1303 = vpop.permute.xlu0 %1302
        %vm1304 = vcmp.eq.s32.totalorder %v735, %v1258
        %vm1305 = vcmp.eq.s32.totalorder %v735, %v1261
        %vm1306 = vcmp.eq.s32.totalorder %v735, %v1264
        %vm1307 = vcmp.eq.s32.totalorder %v735, %v1267
        %vm1308 = vcmp.eq.s32.totalorder %v735, %v1270
        %vm1309 = vcmp.eq.s32.totalorder %v735, %v1273
        %vm1310 = vcmp.eq.s32.totalorder %v735, %v1276
        %vm1311 = vcmp.eq.s32.totalorder %v735, %v1279
        %vm1312 = vcmp.eq.s32.totalorder %v735, %v1282
        %vm1313 = vcmp.eq.s32.totalorder %v735, %v1285
        %vm1314 = vcmp.eq.s32.totalorder %v735, %v1288
        %vm1315 = vcmp.eq.s32.totalorder %v735, %v1291
        %vm1316 = vcmp.eq.s32.totalorder %v735, %v1294
        %vm1317 = vcmp.eq.s32.totalorder %v735, %v1297
        %vm1318 = vcmp.eq.s32.totalorder %v735, %v1300
        %vm1319 = vcmp.eq.s32.totalorder %v735, %v1303
        %v1320 = vsel %vm1304, %v410, 0.0
        %v1321 = vsel %vm1305, %v413, 0.0
        %v1322 = vsel %vm1306, %v416, 0.0
        %v1323 = vsel %vm1307, %v419, 0.0
        %v1324 = vsel %vm1308, %v422, 0.0
        %v1325 = vsel %vm1309, %v425, 0.0
        %v1326 = vsel %vm1310, %v428, 0.0
        %v1327 = vsel %vm1311, %v431, 0.0
        %v1328 = vsel %vm1312, %v434, 0.0
        %v1329 = vsel %vm1313, %v437, 0.0
        %v1330 = vsel %vm1314, %v440, 0.0
        %v1331 = vsel %vm1315, %v443, 0.0
        %v1332 = vsel %vm1316, %v446, 0.0
        %v1333 = vsel %vm1317, %v449, 0.0
        %v1334 = vsel %vm1318, %v452, 0.0
        %v1335 = vsel %vm1319, %v455, 0.0
        %1336 = vadd.xlane.f32.xlu0 %v1320
        %v1337 = vpop.xlane.xlu0 %1336
        %1338 = vadd.xlane.f32.xlu0 %v1321
        %v1339 = vpop.xlane.xlu0 %1338
        %1340 = vadd.xlane.f32.xlu0 %v1322
        %v1341 = vpop.xlane.xlu0 %1340
        %1342 = vadd.xlane.f32.xlu0 %v1323
        %v1343 = vpop.xlane.xlu0 %1342
        %1344 = vadd.xlane.f32.xlu0 %v1324
        %v1345 = vpop.xlane.xlu0 %1344
        %1346 = vadd.xlane.f32.xlu0 %v1325
        %v1347 = vpop.xlane.xlu0 %1346
        %1348 = vadd.xlane.f32.xlu0 %v1326
        %v1349 = vpop.xlane.xlu0 %1348
        %1350 = vadd.xlane.f32.xlu0 %v1327
        %v1351 = vpop.xlane.xlu0 %1350
        %1352 = vadd.xlane.f32.xlu0 %v1328
        %v1353 = vpop.xlane.xlu0 %1352
        %1354 = vadd.xlane.f32.xlu0 %v1329
        %v1355 = vpop.xlane.xlu0 %1354
        %1356 = vadd.xlane.f32.xlu0 %v1330
        %v1357 = vpop.xlane.xlu0 %1356
        %1358 = vadd.xlane.f32.xlu0 %v1331
        %v1359 = vpop.xlane.xlu0 %1358
        %1360 = vadd.xlane.f32.xlu0 %v1332
        %v1361 = vpop.xlane.xlu0 %1360
        %1362 = vadd.xlane.f32.xlu0 %v1333
        %v1363 = vpop.xlane.xlu0 %1362
        %1364 = vadd.xlane.f32.xlu0 %v1334
        %v1365 = vpop.xlane.xlu0 %1364
        %1366 = vadd.xlane.f32.xlu0 %v1335
        %v1367 = vpop.xlane.xlu0 %1366
        %v1368 = vld [vmem:[#allocation4] sm:$0xff]
        %v1369 = vld [vmem:[#allocation4 + $0x8] sm:$0xff]
        %v1370 = vld [vmem:[#allocation4 + $0x10] sm:$0xff]
        %v1371 = vld [vmem:[#allocation4 + $0x18] sm:$0xff]
        %v1372 = vld [vmem:[#allocation4 + $0x20] sm:$0xff]
        %v1373 = vld [vmem:[#allocation4 + $0x28] sm:$0xff]
        %v1374 = vld [vmem:[#allocation4 + $0x30] sm:$0xff]
        %v1375 = vld [vmem:[#allocation4 + $0x38] sm:$0xff]
        %v1376 = vld [vmem:[#allocation4 + $0x40] sm:$0xff]
        %v1377 = vld [vmem:[#allocation4 + $0x48] sm:$0xff]
        %v1378 = vld [vmem:[#allocation4 + $0x50] sm:$0xff]
        %v1379 = vld [vmem:[#allocation4 + $0x58] sm:$0xff]
        %v1380 = vld [vmem:[#allocation4 + $0x60] sm:$0xff]
        %v1381 = vld [vmem:[#allocation4 + $0x68] sm:$0xff]
        %v1382 = vld [vmem:[#allocation4 + $0x70] sm:$0xff]
        %v1383 = vld [vmem:[#allocation4 + $0x78] sm:$0xff]
        %v1384 = vsel %vm1221, %v1337, 0.0
        %v1385 = vsel %vm1221, %v1339, 0.0
        %v1386 = vsel %vm1221, %v1341, 0.0
        %v1387 = vsel %vm1221, %v1343, 0.0
        %v1388 = vsel %vm1221, %v1345, 0.0
        %v1389 = vsel %vm1221, %v1347, 0.0
        %v1390 = vsel %vm1221, %v1349, 0.0
        %v1391 = vsel %vm1221, %v1351, 0.0
        %v1392 = vsel %vm1221, %v1353, 0.0
        %v1393 = vsel %vm1221, %v1355, 0.0
        %v1394 = vsel %vm1221, %v1357, 0.0
        %v1395 = vsel %vm1221, %v1359, 0.0
        %v1396 = vsel %vm1221, %v1361, 0.0
        %v1397 = vsel %vm1221, %v1363, 0.0
        %v1398 = vsel %vm1221, %v1365, 0.0
        %v1399 = vsel %vm1221, %v1367, 0.0
        %v1400 = vadd.f32 %v1368, %v1384
        %v1401 = vadd.f32 %v1369, %v1385
        %v1402 = vadd.f32 %v1370, %v1386
        %v1403 = vadd.f32 %v1371, %v1387
        %v1404 = vadd.f32 %v1372, %v1388
        %v1405 = vadd.f32 %v1373, %v1389
        %v1406 = vadd.f32 %v1374, %v1390
        %v1407 = vadd.f32 %v1375, %v1391
        %v1408 = vadd.f32 %v1376, %v1392
        %v1409 = vadd.f32 %v1377, %v1393
        %v1410 = vadd.f32 %v1378, %v1394
        %v1411 = vadd.f32 %v1379, %v1395
        %v1412 = vadd.f32 %v1380, %v1396
        %v1413 = vadd.f32 %v1381, %v1397
        %v1414 = vadd.f32 %v1382, %v1398
        %v1415 = vadd.f32 %v1383, %v1399
        %vm1416 = vcmask 7168
        %1417 = vst.msk [vmem:[#allocation4] sm:$0xff] %vm1416, %v1400
        %1418 = vst.msk [vmem:[#allocation4 + $0x8] sm:$0xff] %vm1416, %v1401
        %1419 = vst.msk [vmem:[#allocation4 + $0x10] sm:$0xff] %vm1416, %v1402
        %1420 = vst.msk [vmem:[#allocation4 + $0x18] sm:$0xff] %vm1416, %v1403
        %1421 = vst.msk [vmem:[#allocation4 + $0x20] sm:$0xff] %vm1416, %v1404
        %1422 = vst.msk [vmem:[#allocation4 + $0x28] sm:$0xff] %vm1416, %v1405
        %1423 = vst.msk [vmem:[#allocation4 + $0x30] sm:$0xff] %vm1416, %v1406
        %1424 = vst.msk [vmem:[#allocation4 + $0x38] sm:$0xff] %vm1416, %v1407
        %1425 = vst.msk [vmem:[#allocation4 + $0x40] sm:$0xff] %vm1416, %v1408
        %1426 = vst.msk [vmem:[#allocation4 + $0x48] sm:$0xff] %vm1416, %v1409
        %1427 = vst.msk [vmem:[#allocation4 + $0x50] sm:$0xff] %vm1416, %v1410
        %1428 = vst.msk [vmem:[#allocation4 + $0x58] sm:$0xff] %vm1416, %v1411
        %1429 = vst.msk [vmem:[#allocation4 + $0x60] sm:$0xff] %vm1416, %v1412
        %1430 = vst.msk [vmem:[#allocation4 + $0x68] sm:$0xff] %vm1416, %v1413
        %1431 = vst.msk [vmem:[#allocation4 + $0x70] sm:$0xff] %vm1416, %v1414
        %1432 = vst.msk [vmem:[#allocation4 + $0x78] sm:$0xff] %vm1416, %v1415
        %v1433 = vld [vmem:[#allocation5] sm:$0xff]
        %v1434 = vld [vmem:[#allocation5 + $0x8] sm:$0xff]
        %v1435 = vld [vmem:[#allocation5 + $0x10] sm:$0xff]
        %v1436 = vld [vmem:[#allocation5 + $0x18] sm:$0xff]
        %v1437 = vld [vmem:[#allocation5 + $0x20] sm:$0xff]
        %v1438 = vld [vmem:[#allocation5 + $0x28] sm:$0xff]
        %v1439 = vld [vmem:[#allocation5 + $0x30] sm:$0xff]
        %v1440 = vld [vmem:[#allocation5 + $0x38] sm:$0xff]
        %v1441 = vld [vmem:[#allocation5 + $0x40] sm:$0xff]
        %v1442 = vld [vmem:[#allocation5 + $0x48] sm:$0xff]
        %v1443 = vld [vmem:[#allocation5 + $0x50] sm:$0xff]
        %v1444 = vld [vmem:[#allocation5 + $0x58] sm:$0xff]
        %v1445 = vld [vmem:[#allocation5 + $0x60] sm:$0xff]
        %v1446 = vld [vmem:[#allocation5 + $0x68] sm:$0xff]
        %v1447 = vld [vmem:[#allocation5 + $0x70] sm:$0xff]
        %v1448 = vld [vmem:[#allocation5 + $0x78] sm:$0xff]
        %v1449 = vsel %vm1221, 0.0, %v1337
        %v1450 = vsel %vm1221, 0.0, %v1339
        %v1451 = vsel %vm1221, 0.0, %v1341
        %v1452 = vsel %vm1221, 0.0, %v1343
        %v1453 = vsel %vm1221, 0.0, %v1345
        %v1454 = vsel %vm1221, 0.0, %v1347
        %v1455 = vsel %vm1221, 0.0, %v1349
        %v1456 = vsel %vm1221, 0.0, %v1351
        %v1457 = vsel %vm1221, 0.0, %v1353
        %v1458 = vsel %vm1221, 0.0, %v1355
        %v1459 = vsel %vm1221, 0.0, %v1357
        %v1460 = vsel %vm1221, 0.0, %v1359
        %v1461 = vsel %vm1221, 0.0, %v1361
        %v1462 = vsel %vm1221, 0.0, %v1363
        %v1463 = vsel %vm1221, 0.0, %v1365
        %v1464 = vsel %vm1221, 0.0, %v1367
        %v1465 = vadd.f32 %v1433, %v1449
        %v1466 = vadd.f32 %v1434, %v1450
        %v1467 = vadd.f32 %v1435, %v1451
        %v1468 = vadd.f32 %v1436, %v1452
        %v1469 = vadd.f32 %v1437, %v1453
        %v1470 = vadd.f32 %v1438, %v1454
        %v1471 = vadd.f32 %v1439, %v1455
        %v1472 = vadd.f32 %v1440, %v1456
        %v1473 = vadd.f32 %v1441, %v1457
        %v1474 = vadd.f32 %v1442, %v1458
        %v1475 = vadd.f32 %v1443, %v1459
        %v1476 = vadd.f32 %v1444, %v1460
        %v1477 = vadd.f32 %v1445, %v1461
        %v1478 = vadd.f32 %v1446, %v1462
        %v1479 = vadd.f32 %v1447, %v1463
        %v1480 = vadd.f32 %v1448, %v1464
        %1481 = vst.msk [vmem:[#allocation5] sm:$0xff] %vm1416, %v1465
        %1482 = vst.msk [vmem:[#allocation5 + $0x8] sm:$0xff] %vm1416, %v1466
        %1483 = vst.msk [vmem:[#allocation5 + $0x10] sm:$0xff] %vm1416, %v1467
        %1484 = vst.msk [vmem:[#allocation5 + $0x18] sm:$0xff] %vm1416, %v1468
        %1485 = vst.msk [vmem:[#allocation5 + $0x20] sm:$0xff] %vm1416, %v1469
        %1486 = vst.msk [vmem:[#allocation5 + $0x28] sm:$0xff] %vm1416, %v1470
        %1487 = vst.msk [vmem:[#allocation5 + $0x30] sm:$0xff] %vm1416, %v1471
        %1488 = vst.msk [vmem:[#allocation5 + $0x38] sm:$0xff] %vm1416, %v1472
        %1489 = vst.msk [vmem:[#allocation5 + $0x40] sm:$0xff] %vm1416, %v1473
        %1490 = vst.msk [vmem:[#allocation5 + $0x48] sm:$0xff] %vm1416, %v1474
        %1491 = vst.msk [vmem:[#allocation5 + $0x50] sm:$0xff] %vm1416, %v1475
        %1492 = vst.msk [vmem:[#allocation5 + $0x58] sm:$0xff] %vm1416, %v1476
        %1493 = vst.msk [vmem:[#allocation5 + $0x60] sm:$0xff] %vm1416, %v1477
        %1494 = vst.msk [vmem:[#allocation5 + $0x68] sm:$0xff] %vm1416, %v1478
        %1495 = vst.msk [vmem:[#allocation5 + $0x70] sm:$0xff] %vm1416, %v1479
        %1496 = vst.msk [vmem:[#allocation5 + $0x78] sm:$0xff] %vm1416, %v1480
        %p1497 = scmp.eq.s32.totalorder %s26, 2
        // Predicated region
        $region45: #{tpu_custom_call.1} parent=35 // pred_check
          %p1498 = pneg %p1497
        $region46: #{tpu_custom_call.1} parent=35 // pred_check_branch
          %1500 = sbr.rel (%p1498) target = $region48
        $region47: #{tpu_custom_call.1} parent=35 // pred_region
          %v1501 = vld [vmem:[#allocation4] sm:$0xff]
          %v1502 = vld [vmem:[#allocation4 + $0x8] sm:$0xff]
          %v1503 = vld [vmem:[#allocation4 + $0x10] sm:$0xff]
          %v1504 = vld [vmem:[#allocation4 + $0x18] sm:$0xff]
          %v1505 = vld [vmem:[#allocation4 + $0x20] sm:$0xff]
          %v1506 = vld [vmem:[#allocation4 + $0x28] sm:$0xff]
          %v1507 = vld [vmem:[#allocation4 + $0x30] sm:$0xff]
          %v1508 = vld [vmem:[#allocation4 + $0x38] sm:$0xff]
          %v1509 = vld [vmem:[#allocation4 + $0x40] sm:$0xff]
          %v1510 = vld [vmem:[#allocation4 + $0x48] sm:$0xff]
          %v1511 = vld [vmem:[#allocation4 + $0x50] sm:$0xff]
          %v1512 = vld [vmem:[#allocation4 + $0x58] sm:$0xff]
          %v1513 = vld [vmem:[#allocation4 + $0x60] sm:$0xff]
          %v1514 = vld [vmem:[#allocation4 + $0x68] sm:$0xff]
          %v1515 = vld [vmem:[#allocation4 + $0x70] sm:$0xff]
          %v1516 = vld [vmem:[#allocation4 + $0x78] sm:$0xff]
          %v1517 = vld [vmem:[#allocation2] sm:$0xff]
          %v1518 = vld [vmem:[#allocation2 + $0x8] sm:$0xff]
          %v1519 = vld [vmem:[#allocation2 + $0x10] sm:$0xff]
          %v1520 = vld [vmem:[#allocation2 + $0x18] sm:$0xff]
          %v1521 = vld [vmem:[#allocation2 + $0x20] sm:$0xff]
          %v1522 = vld [vmem:[#allocation2 + $0x28] sm:$0xff]
          %v1523 = vld [vmem:[#allocation2 + $0x30] sm:$0xff]
          %v1524 = vld [vmem:[#allocation2 + $0x38] sm:$0xff]
          %v1525 = vld [vmem:[#allocation2 + $0x40] sm:$0xff]
          %v1526 = vld [vmem:[#allocation2 + $0x48] sm:$0xff]
          %v1527 = vld [vmem:[#allocation2 + $0x50] sm:$0xff]
          %v1528 = vld [vmem:[#allocation2 + $0x58] sm:$0xff]
          %v1529 = vld [vmem:[#allocation2 + $0x60] sm:$0xff]
          %v1530 = vld [vmem:[#allocation2 + $0x68] sm:$0xff]
          %v1531 = vld [vmem:[#allocation2 + $0x70] sm:$0xff]
          %v1532 = vld [vmem:[#allocation2 + $0x78] sm:$0xff]
          %v1533 = vsub.f32 %v1501, %v1517
          %v1534 = vsub.f32 %v1502, %v1518
          %v1535 = vsub.f32 %v1503, %v1519
          %v1536 = vsub.f32 %v1504, %v1520
          %v1537 = vsub.f32 %v1505, %v1521
          %v1538 = vsub.f32 %v1506, %v1522
          %v1539 = vsub.f32 %v1507, %v1523
          %v1540 = vsub.f32 %v1508, %v1524
          %v1541 = vsub.f32 %v1509, %v1525
          %v1542 = vsub.f32 %v1510, %v1526
          %v1543 = vsub.f32 %v1511, %v1527
          %v1544 = vsub.f32 %v1512, %v1528
          %v1545 = vsub.f32 %v1513, %v1529
          %v1546 = vsub.f32 %v1514, %v1530
          %v1547 = vsub.f32 %v1515, %v1531
          %v1548 = vsub.f32 %v1516, %v1532
          %v1549 = vld [vmem:[#allocation3] sm:$0xff]
          %v1550 = vld [vmem:[#allocation3 + $0x8] sm:$0xff]
          %v1551 = vld [vmem:[#allocation3 + $0x10] sm:$0xff]
          %v1552 = vld [vmem:[#allocation3 + $0x18] sm:$0xff]
          %v1553 = vld [vmem:[#allocation3 + $0x20] sm:$0xff]
          %v1554 = vld [vmem:[#allocation3 + $0x28] sm:$0xff]
          %v1555 = vld [vmem:[#allocation3 + $0x30] sm:$0xff]
          %v1556 = vld [vmem:[#allocation3 + $0x38] sm:$0xff]
          %v1557 = vld [vmem:[#allocation3 + $0x40] sm:$0xff]
          %v1558 = vld [vmem:[#allocation3 + $0x48] sm:$0xff]
          %v1559 = vld [vmem:[#allocation3 + $0x50] sm:$0xff]
          %v1560 = vld [vmem:[#allocation3 + $0x58] sm:$0xff]
          %v1561 = vld [vmem:[#allocation3 + $0x60] sm:$0xff]
          %v1562 = vld [vmem:[#allocation3 + $0x68] sm:$0xff]
          %v1563 = vld [vmem:[#allocation3 + $0x70] sm:$0xff]
          %v1564 = vld [vmem:[#allocation3 + $0x78] sm:$0xff]
          %v1565 = vlog2.pop %v1549
          %v1566 = vmul.f32 %v1565, 0.6931472
          %v1567 = vlog2.pop %v1550
          %v1568 = vmul.f32 %v1567, 0.6931472
          %v1569 = vlog2.pop %v1551
          %v1570 = vmul.f32 %v1569, 0.6931472
          %v1571 = vlog2.pop %v1552
          %v1572 = vmul.f32 %v1571, 0.6931472
          %v1573 = vlog2.pop %v1553
          %v1574 = vmul.f32 %v1573, 0.6931472
          %v1575 = vlog2.pop %v1554
          %v1576 = vmul.f32 %v1575, 0.6931472
          %v1577 = vlog2.pop %v1555
          %v1578 = vmul.f32 %v1577, 0.6931472
          %v1579 = vlog2.pop %v1556
          %v1580 = vmul.f32 %v1579, 0.6931472
          %v1581 = vlog2.pop %v1557
          %v1582 = vmul.f32 %v1581, 0.6931472
          %v1583 = vlog2.pop %v1558
          %v1584 = vmul.f32 %v1583, 0.6931472
          %v1585 = vlog2.pop %v1559
          %v1586 = vmul.f32 %v1585, 0.6931472
          %v1587 = vlog2.pop %v1560
          %v1588 = vmul.f32 %v1587, 0.6931472
          %v1589 = vlog2.pop %v1561
          %v1590 = vmul.f32 %v1589, 0.6931472
          %v1591 = vlog2.pop %v1562
          %v1592 = vmul.f32 %v1591, 0.6931472
          %v1593 = vlog2.pop %v1563
          %v1594 = vmul.f32 %v1593, 0.6931472
          %v1595 = vlog2.pop %v1564
          %v1596 = vmul.f32 %v1595, 0.6931472
          %v1597 = vsub.f32 %v1533, %v1566
          %v1598 = vsub.f32 %v1534, %v1568
          %v1599 = vsub.f32 %v1535, %v1570
          %v1600 = vsub.f32 %v1536, %v1572
          %v1601 = vsub.f32 %v1537, %v1574
          %v1602 = vsub.f32 %v1538, %v1576
          %v1603 = vsub.f32 %v1539, %v1578
          %v1604 = vsub.f32 %v1540, %v1580
          %v1605 = vsub.f32 %v1541, %v1582
          %v1606 = vsub.f32 %v1542, %v1584
          %v1607 = vsub.f32 %v1543, %v1586
          %v1608 = vsub.f32 %v1544, %v1588
          %v1609 = vsub.f32 %v1545, %v1590
          %v1610 = vsub.f32 %v1546, %v1592
          %v1611 = vsub.f32 %v1547, %v1594
          %v1612 = vsub.f32 %v1548, %v1596
          %v1613 = vld [vmem:[#allocation5] sm:$0xff]
          %v1614 = vld [vmem:[#allocation5 + $0x8] sm:$0xff]
          %v1615 = vld [vmem:[#allocation5 + $0x10] sm:$0xff]
          %v1616 = vld [vmem:[#allocation5 + $0x18] sm:$0xff]
          %v1617 = vld [vmem:[#allocation5 + $0x20] sm:$0xff]
          %v1618 = vld [vmem:[#allocation5 + $0x28] sm:$0xff]
          %v1619 = vld [vmem:[#allocation5 + $0x30] sm:$0xff]
          %v1620 = vld [vmem:[#allocation5 + $0x38] sm:$0xff]
          %v1621 = vld [vmem:[#allocation5 + $0x40] sm:$0xff]
          %v1622 = vld [vmem:[#allocation5 + $0x48] sm:$0xff]
          %v1623 = vld [vmem:[#allocation5 + $0x50] sm:$0xff]
          %v1624 = vld [vmem:[#allocation5 + $0x58] sm:$0xff]
          %v1625 = vld [vmem:[#allocation5 + $0x60] sm:$0xff]
          %v1626 = vld [vmem:[#allocation5 + $0x68] sm:$0xff]
          %v1627 = vld [vmem:[#allocation5 + $0x70] sm:$0xff]
          %v1628 = vld [vmem:[#allocation5 + $0x78] sm:$0xff]
          %1645 = vrot.lane.b32.xlu0 %v1517, 127
          %v1646 = vpop.permute.xlu0 %1645
          %1647 = vrot.lane.b32.xlu0 %v1518, 127
          %v1648 = vpop.permute.xlu0 %1647
          %1649 = vrot.lane.b32.xlu0 %v1519, 127
          %v1650 = vpop.permute.xlu0 %1649
          %1651 = vrot.lane.b32.xlu0 %v1520, 127
          %v1652 = vpop.permute.xlu0 %1651
          %1653 = vrot.lane.b32.xlu0 %v1521, 127
          %v1654 = vpop.permute.xlu0 %1653
          %1655 = vrot.lane.b32.xlu0 %v1522, 127
          %v1656 = vpop.permute.xlu0 %1655
          %1657 = vrot.lane.b32.xlu0 %v1523, 127
          %v1658 = vpop.permute.xlu0 %1657
          %1659 = vrot.lane.b32.xlu0 %v1524, 127
          %v1660 = vpop.permute.xlu0 %1659
          %1661 = vrot.lane.b32.xlu0 %v1525, 127
          %v1662 = vpop.permute.xlu0 %1661
          %1663 = vrot.lane.b32.xlu0 %v1526, 127
          %v1664 = vpop.permute.xlu0 %1663
          %1665 = vrot.lane.b32.xlu0 %v1527, 127
          %v1666 = vpop.permute.xlu0 %1665
          %1667 = vrot.lane.b32.xlu0 %v1528, 127
          %v1668 = vpop.permute.xlu0 %1667
          %1669 = vrot.lane.b32.xlu0 %v1529, 127
          %v1670 = vpop.permute.xlu0 %1669
          %1671 = vrot.lane.b32.xlu0 %v1530, 127
          %v1672 = vpop.permute.xlu0 %1671
          %1673 = vrot.lane.b32.xlu0 %v1531, 127
          %v1674 = vpop.permute.xlu0 %1673
          %1675 = vrot.lane.b32.xlu0 %v1532, 127
          %v1676 = vpop.permute.xlu0 %1675
          %v1693 = vsub.f32 %v1613, %v1646
          %v1694 = vsub.f32 %v1614, %v1648
          %v1695 = vsub.f32 %v1615, %v1650
          %v1696 = vsub.f32 %v1616, %v1652
          %v1697 = vsub.f32 %v1617, %v1654
          %v1698 = vsub.f32 %v1618, %v1656
          %v1699 = vsub.f32 %v1619, %v1658
          %v1700 = vsub.f32 %v1620, %v1660
          %v1701 = vsub.f32 %v1621, %v1662
          %v1702 = vsub.f32 %v1622, %v1664
          %v1703 = vsub.f32 %v1623, %v1666
          %v1704 = vsub.f32 %v1624, %v1668
          %v1705 = vsub.f32 %v1625, %v1670
          %v1706 = vsub.f32 %v1626, %v1672
          %v1707 = vsub.f32 %v1627, %v1674
          %v1708 = vsub.f32 %v1628, %v1676
          %1725 = vrot.lane.b32.xlu0 %v1566, 127
          %v1726 = vpop.permute.xlu0 %1725
          %1727 = vrot.lane.b32.xlu0 %v1568, 127
          %v1728 = vpop.permute.xlu0 %1727
          %1729 = vrot.lane.b32.xlu0 %v1570, 127
          %v1730 = vpop.permute.xlu0 %1729
          %1731 = vrot.lane.b32.xlu0 %v1572, 127
          %v1732 = vpop.permute.xlu0 %1731
          %1733 = vrot.lane.b32.xlu0 %v1574, 127
          %v1734 = vpop.permute.xlu0 %1733
          %1735 = vrot.lane.b32.xlu0 %v1576, 127
          %v1736 = vpop.permute.xlu0 %1735
          %1737 = vrot.lane.b32.xlu0 %v1578, 127
          %v1738 = vpop.permute.xlu0 %1737
          %1739 = vrot.lane.b32.xlu0 %v1580, 127
          %v1740 = vpop.permute.xlu0 %1739
          %1741 = vrot.lane.b32.xlu0 %v1582, 127
          %v1742 = vpop.permute.xlu0 %1741
          %1743 = vrot.lane.b32.xlu0 %v1584, 127
          %v1744 = vpop.permute.xlu0 %1743
          %1745 = vrot.lane.b32.xlu0 %v1586, 127
          %v1746 = vpop.permute.xlu0 %1745
          %1747 = vrot.lane.b32.xlu0 %v1588, 127
          %v1748 = vpop.permute.xlu0 %1747
          %1749 = vrot.lane.b32.xlu0 %v1590, 127
          %v1750 = vpop.permute.xlu0 %1749
          %1751 = vrot.lane.b32.xlu0 %v1592, 127
          %v1752 = vpop.permute.xlu0 %1751
          %1753 = vrot.lane.b32.xlu0 %v1594, 127
          %v1754 = vpop.permute.xlu0 %1753
          %1755 = vrot.lane.b32.xlu0 %v1596, 127
          %v1756 = vpop.permute.xlu0 %1755
          %v1773 = vsub.f32 %v1693, %v1726
          %v1774 = vsub.f32 %v1694, %v1728
          %v1775 = vsub.f32 %v1695, %v1730
          %v1776 = vsub.f32 %v1696, %v1732
          %v1777 = vsub.f32 %v1697, %v1734
          %v1778 = vsub.f32 %v1698, %v1736
          %v1779 = vsub.f32 %v1699, %v1738
          %v1780 = vsub.f32 %v1700, %v1740
          %v1781 = vsub.f32 %v1701, %v1742
          %v1782 = vsub.f32 %v1702, %v1744
          %v1783 = vsub.f32 %v1703, %v1746
          %v1784 = vsub.f32 %v1704, %v1748
          %v1785 = vsub.f32 %v1705, %v1750
          %v1786 = vsub.f32 %v1706, %v1752
          %v1787 = vsub.f32 %v1707, %v1754
          %v1788 = vsub.f32 %v1708, %v1756
          %vm1789 = vcmp.eq.s32.totalorder %v654, 1
          %vm1790 = vcmp.eq.s32.totalorder %v655, 1
          %vm1791 = vcmp.eq.s32.totalorder %v656, 1
          %vm1792 = vcmp.eq.s32.totalorder %v657, 1
          %vm1793 = vcmp.eq.s32.totalorder %v658, 1
          %vm1794 = vcmp.eq.s32.totalorder %v659, 1
          %vm1795 = vcmp.eq.s32.totalorder %v660, 1
          %vm1796 = vcmp.eq.s32.totalorder %v661, 1
          %vm1797 = vcmp.eq.s32.totalorder %v662, 1
          %vm1798 = vcmp.eq.s32.totalorder %v663, 1
          %vm1799 = vcmp.eq.s32.totalorder %v664, 1
          %vm1800 = vcmp.eq.s32.totalorder %v665, 1
          %vm1801 = vcmp.eq.s32.totalorder %v666, 1
          %vm1802 = vcmp.eq.s32.totalorder %v667, 1
          %vm1803 = vcmp.eq.s32.totalorder %v668, 1
          %vm1804 = vcmp.eq.s32.totalorder %v669, 1
          %v1805 = vsel %vm1789, %v1773, 0.0
          %v1806 = vsel %vm1790, %v1774, 0.0
          %v1807 = vsel %vm1791, %v1775, 0.0
          %v1808 = vsel %vm1792, %v1776, 0.0
          %v1809 = vsel %vm1793, %v1777, 0.0
          %v1810 = vsel %vm1794, %v1778, 0.0
          %v1811 = vsel %vm1795, %v1779, 0.0
          %v1812 = vsel %vm1796, %v1780, 0.0
          %v1813 = vsel %vm1797, %v1781, 0.0
          %v1814 = vsel %vm1798, %v1782, 0.0
          %v1815 = vsel %vm1799, %v1783, 0.0
          %v1816 = vsel %vm1800, %v1784, 0.0
          %v1817 = vsel %vm1801, %v1785, 0.0
          %v1818 = vsel %vm1802, %v1786, 0.0
          %v1819 = vsel %vm1803, %v1787, 0.0
          %v1820 = vsel %vm1804, %v1788, 0.0
          %v1821 = vadd.f32 %v1597, %v1805
          %v1822 = vadd.f32 %v1598, %v1806
          %v1823 = vadd.f32 %v1599, %v1807
          %v1824 = vadd.f32 %v1600, %v1808
          %v1825 = vadd.f32 %v1601, %v1809
          %v1826 = vadd.f32 %v1602, %v1810
          %v1827 = vadd.f32 %v1603, %v1811
          %v1828 = vadd.f32 %v1604, %v1812
          %v1829 = vadd.f32 %v1605, %v1813
          %v1830 = vadd.f32 %v1606, %v1814
          %v1831 = vadd.f32 %v1607, %v1815
          %v1832 = vadd.f32 %v1608, %v1816
          %v1833 = vadd.f32 %v1609, %v1817
          %v1834 = vadd.f32 %v1610, %v1818
          %v1835 = vadd.f32 %v1611, %v1819
          %v1836 = vadd.f32 %v1612, %v1820
          %1837 = vrot.lane.b32.xlu0 %v1517, 126
          %v1838 = vpop.permute.xlu0 %1837
          %1839 = vrot.lane.b32.xlu0 %v1518, 126
          %v1840 = vpop.permute.xlu0 %1839
          %1841 = vrot.lane.b32.xlu0 %v1519, 126
          %v1842 = vpop.permute.xlu0 %1841
          %1843 = vrot.lane.b32.xlu0 %v1520, 126
          %v1844 = vpop.permute.xlu0 %1843
          %1845 = vrot.lane.b32.xlu0 %v1521, 126
          %v1846 = vpop.permute.xlu0 %1845
          %1847 = vrot.lane.b32.xlu0 %v1522, 126
          %v1848 = vpop.permute.xlu0 %1847
          %1849 = vrot.lane.b32.xlu0 %v1523, 126
          %v1850 = vpop.permute.xlu0 %1849
          %1851 = vrot.lane.b32.xlu0 %v1524, 126
          %v1852 = vpop.permute.xlu0 %1851
          %1853 = vrot.lane.b32.xlu0 %v1525, 126
          %v1854 = vpop.permute.xlu0 %1853
          %1855 = vrot.lane.b32.xlu0 %v1526, 126
          %v1856 = vpop.permute.xlu0 %1855
          %1857 = vrot.lane.b32.xlu0 %v1527, 126
          %v1858 = vpop.permute.xlu0 %1857
          %1859 = vrot.lane.b32.xlu0 %v1528, 126
          %v1860 = vpop.permute.xlu0 %1859
          %1861 = vrot.lane.b32.xlu0 %v1529, 126
          %v1862 = vpop.permute.xlu0 %1861
          %1863 = vrot.lane.b32.xlu0 %v1530, 126
          %v1864 = vpop.permute.xlu0 %1863
          %1865 = vrot.lane.b32.xlu0 %v1531, 126
          %v1866 = vpop.permute.xlu0 %1865
          %1867 = vrot.lane.b32.xlu0 %v1532, 126
          %v1868 = vpop.permute.xlu0 %1867
          %v1885 = vsub.f32 %v1613, %v1838
          %v1886 = vsub.f32 %v1614, %v1840
          %v1887 = vsub.f32 %v1615, %v1842
          %v1888 = vsub.f32 %v1616, %v1844
          %v1889 = vsub.f32 %v1617, %v1846
          %v1890 = vsub.f32 %v1618, %v1848
          %v1891 = vsub.f32 %v1619, %v1850
          %v1892 = vsub.f32 %v1620, %v1852
          %v1893 = vsub.f32 %v1621, %v1854
          %v1894 = vsub.f32 %v1622, %v1856
          %v1895 = vsub.f32 %v1623, %v1858
          %v1896 = vsub.f32 %v1624, %v1860
          %v1897 = vsub.f32 %v1625, %v1862
          %v1898 = vsub.f32 %v1626, %v1864
          %v1899 = vsub.f32 %v1627, %v1866
          %v1900 = vsub.f32 %v1628, %v1868
          %1901 = vrot.lane.b32.xlu0 %v1566, 126
          %v1902 = vpop.permute.xlu0 %1901
          %1903 = vrot.lane.b32.xlu0 %v1568, 126
          %v1904 = vpop.permute.xlu0 %1903
          %1905 = vrot.lane.b32.xlu0 %v1570, 126
          %v1906 = vpop.permute.xlu0 %1905
          %1907 = vrot.lane.b32.xlu0 %v1572, 126
          %v1908 = vpop.permute.xlu0 %1907
          %1909 = vrot.lane.b32.xlu0 %v1574, 126
          %v1910 = vpop.permute.xlu0 %1909
          %1911 = vrot.lane.b32.xlu0 %v1576, 126
          %v1912 = vpop.permute.xlu0 %1911
          %1913 = vrot.lane.b32.xlu0 %v1578, 126
          %v1914 = vpop.permute.xlu0 %1913
          %1915 = vrot.lane.b32.xlu0 %v1580, 126
          %v1916 = vpop.permute.xlu0 %1915
          %1917 = vrot.lane.b32.xlu0 %v1582, 126
          %v1918 = vpop.permute.xlu0 %1917
          %1919 = vrot.lane.b32.xlu0 %v1584, 126
          %v1920 = vpop.permute.xlu0 %1919
          %1921 = vrot.lane.b32.xlu0 %v1586, 126
          %v1922 = vpop.permute.xlu0 %1921
          %1923 = vrot.lane.b32.xlu0 %v1588, 126
          %v1924 = vpop.permute.xlu0 %1923
          %1925 = vrot.lane.b32.xlu0 %v1590, 126
          %v1926 = vpop.permute.xlu0 %1925
          %1927 = vrot.lane.b32.xlu0 %v1592, 126
          %v1928 = vpop.permute.xlu0 %1927
          %1929 = vrot.lane.b32.xlu0 %v1594, 126
          %v1930 = vpop.permute.xlu0 %1929
          %1931 = vrot.lane.b32.xlu0 %v1596, 126
          %v1932 = vpop.permute.xlu0 %1931
          %v1949 = vsub.f32 %v1885, %v1902
          %v1950 = vsub.f32 %v1886, %v1904
          %v1951 = vsub.f32 %v1887, %v1906
          %v1952 = vsub.f32 %v1888, %v1908
          %v1953 = vsub.f32 %v1889, %v1910
          %v1954 = vsub.f32 %v1890, %v1912
          %v1955 = vsub.f32 %v1891, %v1914
          %v1956 = vsub.f32 %v1892, %v1916
          %v1957 = vsub.f32 %v1893, %v1918
          %v1958 = vsub.f32 %v1894, %v1920
          %v1959 = vsub.f32 %v1895, %v1922
          %v1960 = vsub.f32 %v1896, %v1924
          %v1961 = vsub.f32 %v1897, %v1926
          %v1962 = vsub.f32 %v1898, %v1928
          %v1963 = vsub.f32 %v1899, %v1930
          %v1964 = vsub.f32 %v1900, %v1932
          %vm1965 = vcmp.eq.s32.totalorder %v654, 2
          %vm1966 = vcmp.eq.s32.totalorder %v655, 2
          %vm1967 = vcmp.eq.s32.totalorder %v656, 2
          %vm1968 = vcmp.eq.s32.totalorder %v657, 2
          %vm1969 = vcmp.eq.s32.totalorder %v658, 2
          %vm1970 = vcmp.eq.s32.totalorder %v659, 2
          %vm1971 = vcmp.eq.s32.totalorder %v660, 2
          %vm1972 = vcmp.eq.s32.totalorder %v661, 2
          %vm1973 = vcmp.eq.s32.totalorder %v662, 2
          %vm1974 = vcmp.eq.s32.totalorder %v663, 2
          %vm1975 = vcmp.eq.s32.totalorder %v664, 2
          %vm1976 = vcmp.eq.s32.totalorder %v665, 2
          %vm1977 = vcmp.eq.s32.totalorder %v666, 2
          %vm1978 = vcmp.eq.s32.totalorder %v667, 2
          %vm1979 = vcmp.eq.s32.totalorder %v668, 2
          %vm1980 = vcmp.eq.s32.totalorder %v669, 2
          %v1981 = vsel %vm1965, %v1949, 0.0
          %v1982 = vsel %vm1966, %v1950, 0.0
          %v1983 = vsel %vm1967, %v1951, 0.0
          %v1984 = vsel %vm1968, %v1952, 0.0
          %v1985 = vsel %vm1969, %v1953, 0.0
          %v1986 = vsel %vm1970, %v1954, 0.0
          %v1987 = vsel %vm1971, %v1955, 0.0
          %v1988 = vsel %vm1972, %v1956, 0.0
          %v1989 = vsel %vm1973, %v1957, 0.0
          %v1990 = vsel %vm1974, %v1958, 0.0
          %v1991 = vsel %vm1975, %v1959, 0.0
          %v1992 = vsel %vm1976, %v1960, 0.0
          %v1993 = vsel %vm1977, %v1961, 0.0
          %v1994 = vsel %vm1978, %v1962, 0.0
          %v1995 = vsel %vm1979, %v1963, 0.0
          %v1996 = vsel %vm1980, %v1964, 0.0
          %v1997 = vadd.f32 %v1821, %v1981
          %v1998 = vadd.f32 %v1822, %v1982
          %v1999 = vadd.f32 %v1823, %v1983
          %v2000 = vadd.f32 %v1824, %v1984
          %v2001 = vadd.f32 %v1825, %v1985
          %v2002 = vadd.f32 %v1826, %v1986
          %v2003 = vadd.f32 %v1827, %v1987
          %v2004 = vadd.f32 %v1828, %v1988
          %v2005 = vadd.f32 %v1829, %v1989
          %v2006 = vadd.f32 %v1830, %v1990
          %v2007 = vadd.f32 %v1831, %v1991
          %v2008 = vadd.f32 %v1832, %v1992
          %v2009 = vadd.f32 %v1833, %v1993
          %v2010 = vadd.f32 %v1834, %v1994
          %v2011 = vadd.f32 %v1835, %v1995
          %v2012 = vadd.f32 %v1836, %v1996
          %2014 = vset.pattern.permute.xlu0 0
          %2015 = vperm.xlu0 %2014, %v1997
          %v2016 = vpop.permute.xlu0 %2015
          %2019 = vset.pattern.permute.xlu0 0
          %2020 = vperm.xlu0 %2019, %v1998
          %v2021 = vpop.permute.xlu0 %2020
          %2024 = vset.pattern.permute.xlu0 0
          %2025 = vperm.xlu0 %2024, %v1999
          %v2026 = vpop.permute.xlu0 %2025
          %2029 = vset.pattern.permute.xlu0 0
          %2030 = vperm.xlu0 %2029, %v2000
          %v2031 = vpop.permute.xlu0 %2030
          %2034 = vset.pattern.permute.xlu0 0
          %2035 = vperm.xlu0 %2034, %v2001
          %v2036 = vpop.permute.xlu0 %2035
          %2039 = vset.pattern.permute.xlu0 0
          %2040 = vperm.xlu0 %2039, %v2002
          %v2041 = vpop.permute.xlu0 %2040
          %2044 = vset.pattern.permute.xlu0 0
          %2045 = vperm.xlu0 %2044, %v2003
          %v2046 = vpop.permute.xlu0 %2045
          %2049 = vset.pattern.permute.xlu0 0
          %2050 = vperm.xlu0 %2049, %v2004
          %v2051 = vpop.permute.xlu0 %2050
          %2054 = vset.pattern.permute.xlu0 0
          %2055 = vperm.xlu0 %2054, %v2005
          %v2056 = vpop.permute.xlu0 %2055
          %2059 = vset.pattern.permute.xlu0 0
          %2060 = vperm.xlu0 %2059, %v2006
          %v2061 = vpop.permute.xlu0 %2060
          %2064 = vset.pattern.permute.xlu0 0
          %2065 = vperm.xlu0 %2064, %v2007
          %v2066 = vpop.permute.xlu0 %2065
          %2069 = vset.pattern.permute.xlu0 0
          %2070 = vperm.xlu0 %2069, %v2008
          %v2071 = vpop.permute.xlu0 %2070
          %2074 = vset.pattern.permute.xlu0 0
          %2075 = vperm.xlu0 %2074, %v2009
          %v2076 = vpop.permute.xlu0 %2075
          %2079 = vset.pattern.permute.xlu0 0
          %2080 = vperm.xlu0 %2079, %v2010
          %v2081 = vpop.permute.xlu0 %2080
          %2084 = vset.pattern.permute.xlu0 0
          %2085 = vperm.xlu0 %2084, %v2011
          %v2086 = vpop.permute.xlu0 %2085
          %2089 = vset.pattern.permute.xlu0 0
          %2090 = vperm.xlu0 %2089, %v2012
          %v2091 = vpop.permute.xlu0 %2090
          %2093 = vxpose.xlu0.b32.start [1/16] %v2016, 128
          %2094 = vxpose.xlu0.b32.cont [2/16] %v2021, 128
          %2095 = vxpose.xlu0.b32.cont [3/16] %v2026, 128
          %2096 = vxpose.xlu0.b32.cont [4/16] %v2031, 128
          %2097 = vxpose.xlu0.b32.cont [5/16] %v2036, 128
          %2098 = vxpose.xlu0.b32.cont [6/16] %v2041, 128
          %2099 = vxpose.xlu0.b32.cont [7/16] %v2046, 128
          %2100 = vxpose.xlu0.b32.cont [8/16] %v2051, 128
          %2101 = vxpose.xlu0.b32.cont [9/16] %v2056, 128
          %2102 = vxpose.xlu0.b32.cont [10/16] %v2061, 128
          %2103 = vxpose.xlu0.b32.cont [11/16] %v2066, 128
          %2104 = vxpose.xlu0.b32.cont [12/16] %v2071, 128
          %2105 = vxpose.xlu0.b32.cont [13/16] %v2076, 128
          %2106 = vxpose.xlu0.b32.cont [14/16] %v2081, 128
          %2107 = vxpose.xlu0.b32.cont [15/16] %v2086, 128
          %2108 = vxpose.xlu0.b32.end [16/16] %v2091, 128
          %v2109 = vpop.trf.xlu0
          %v2110 = vpop.trf.xlu0
          %v2111 = vpop.trf.xlu0
          %v2112 = vpop.trf.xlu0
          %v2113 = vpop.trf.xlu0
          %v2114 = vpop.trf.xlu0
          %v2115 = vpop.trf.xlu0
          %v2116 = vpop.trf.xlu0
          %v2117 = vpop.trf.xlu0
          %v2118 = vpop.trf.xlu0
          %v2119 = vpop.trf.xlu0
          %v2120 = vpop.trf.xlu0
          %v2121 = vpop.trf.xlu0
          %v2122 = vpop.trf.xlu0
          %v2123 = vpop.trf.xlu0
          %v2124 = vpop.trf.xlu0
          %2125 = vst [vmem:[%s270] sm:$0x1] %v2109
        $region48: #{tpu_custom_call.1} parent=35 // pred_fallthru
          _
        %s2126 = sand.u32 %s145, 1
        %s2127 = scalar_lea.sflag [#allocation8], %s2126
        %s2128 = sand.u32 %s145, 1
        %s2129 = scalar_lea.vmem [#allocation9], %s2128
        // Predicated region
        $region49: #{tpu_custom_call.1} parent=35 // pred_check
          %p2130 = pneg %p155
        $region50: #{tpu_custom_call.1} parent=35 // pred_check_branch
          %2132 = sbr.rel (%p2130) target = $region52
        $region51: #{tpu_custom_call.1} parent=35 // pred_region
          %2134 = vsyncadd %s2127, 0
          %s2135 = scalar_lea.hbm %s4, %s25
          %s2137 = sshll.u32 %s2129, 4
          %s2138 = int_to_ptr.vmem [resolvable:$true] %s2137
          %s2139 = sshll.u32 %s2135, 4
          %s2140 = int_to_ptr.hbm [resolvable:$true] %s2139
          %2142 = dma.vmem_to_hbm [thread:$0]  %s2138, 16, %s2140, %s2127
        $region52: #{tpu_custom_call.1} parent=35 // pred_fallthru
          _
      $region36: #{tpu_custom_call.1} parent=5 // pred_fallthru
        _
      %p2143 = scmp.le.s32.totalorder 2, %s16
      // Predicated region
      $region53: #{tpu_custom_call.1} parent=5 // pred_check
        %p2144 = pneg %p2143
      $region54: #{tpu_custom_call.1} parent=5 // pred_check_branch
        %2146 = sbr.rel (%p2144) target = $region56
      $region55: #{tpu_custom_call.1} parent=5 // pred_region
        %s2147 = ssub.s32 %s16, 2
        // Predicated region
        $region57: #{tpu_custom_call.1} parent=55 // pred_check
          %p2148 = pneg %p161
        $region58: #{tpu_custom_call.1} parent=55 // pred_check_branch
          %2150 = sbr.rel (%p2148) target = $region60
        $region59: #{tpu_custom_call.1} parent=55 // pred_region
          %s2151 = sand.u32 %s146, 1
          %s2152 = scalar_lea.sflag [#allocation8], %s2151
          %s2153 = sand.u32 %s146, 1
          %s2154 = scalar_lea.vmem [#allocation9], %s2153
          %2156 = dma.done %s2152, 16
        $region60: #{tpu_custom_call.1} parent=55 // pred_fallthru
          _
      $region56: #{tpu_custom_call.1} parent=5 // pred_fallthru
        _
    $region6: #{tpu_custom_call.1} parent=1 // loop_footer
      %s20 = sadd.s32 1, %s16
    $region7: #{tpu_custom_call.1} parent=1 // loop_footer_branch
      %15 = sbr.rel target = $region3
    $region8: #{tpu_custom_call.1} parent=1 // loop_exit
      _
    %2157 = vsyncpa [#allocation7], 1
    %s2158 = scalar_lea.sflag [#allocation7], 1
    %2159 = vsyncpa %s2158, 1
    %2160 = vsyncpa [#allocation8], 1
    %s2161 = scalar_lea.sflag [#allocation8], 1
    %2162 = vsyncpa %s2161, 1

</llo_original>
